<compile_context>
chip_gen: v7x
topology: tpu7x:2x2x1
jax: 0.10.0
libtpu: 0.0.40
codegen_flags: <defaults>
</compile_context>

<pallas_src>
import functools
import math

import jax
import jax.numpy as jnp
from jax.experimental import pallas as pl
from jax.experimental.pallas import tpu as pltpu

POOL = 4      # nn.MaxPool2d(kernel_size=4)
KSIZE = 3     # nn.Conv2d(kernel_size=3)
AVPAD = 128   # lane-dense padded width of the fused adv/value projection


def _round_up(v, m):
    return (v + m - 1) // m * m


# ---------------------------------------------------------------------------
# Wrapper-side im2col for conv1, pool-TAP-major row order.
# For tap t = pi*pool + pj, rows [t*npad, t*npad + Hp*Wp) hold the 3x3 patch at
# conv position (h*pool + pi, w*pool + pj) for pooled position n = h*Wp + w
# (row-major); rows [t*npad + Hp*Wp, (t+1)*npad) are zero padding (8-aligned).
# ---------------------------------------------------------------------------
def _conv1_patches_tap_major(x_nhwc, ksize, pool, npad):
    B, H, W, Cin = x_nhwc.shape
    Hc, Wc = H - ksize + 1, W - ksize + 1
    Hp, Wp = Hc // pool, Wc // pool                      # floor max-pool
    taps = [x_nhwc[:, i:i + Hc, j:j + Wc, :]
            for i in range(ksize) for j in range(ksize)]
    pat = jnp.stack(taps, axis=3).reshape(B, Hc, Wc, ksize * ksize * Cin)
    pat = pat[:, :Hp * pool, :Wp * pool, :]
    pat = pat.reshape(B, Hp, pool, Wp, pool, ksize * ksize * Cin)
    pat = pat.transpose(0, 2, 4, 1, 3, 5)                # (B, pi, pj, Hp, Wp, K)
    pat = pat.reshape(B, pool * pool, Hp * Wp, ksize * ksize * Cin)
    pat = jnp.pad(pat, ((0, 0), (0, 0), (0, npad - Hp * Wp), (0, 0)))
    return pat.reshape(B, pool * pool * npad, ksize * ksize * Cin), (Hp, Wp)


# ---------------------------------------------------------------------------
# Fused per-image kernel: conv1 (one matmul) + pool + relu, conv2 built from 9
# shifted slices of the resident conv1 map, pool + relu, head MLP, dueling.
# ---------------------------------------------------------------------------
def _dqn_kernel(p1_ref, mask_ref, w1_ref, b1_ref, w2_ref, b2_ref,
                h1w_ref, h1b_ref, h2w_ref, h2b_ref, wav_ref, bav_ref,
                o_ref, *, pool, ksize, w1_width, n_actions):
    pp = pool * pool
    npad = p1_ref.shape[0] // pp
    cout = w1_ref.shape[1]
    L = mask_ref.shape[0]

    # conv1: ONE (pp*npad, K1)x(K1, C) bf16 matmul; tap-major rows make the 4x4
    # max-pool an elementwise vmax chain over the leading axis (VPU, no XLU).
    acc1 = jnp.dot(p1_ref[...], w1_ref[...], preferred_element_type=jnp.float32)
    acc1 = acc1.reshape(pp, npad, cout)                  # 8-aligned row regroup
    x1 = jnp.maximum(jnp.max(acc1, axis=0) + b1_ref[...], 0.0)   # (npad, C) f32

    # conv2: each 3x3 tap is a statically shifted row slice of the conv1 map
    # (row h*W1 + w), one (L, C)x(C, C) matmul per tap, accumulated in f32.
    z = jnp.zeros((L, cout), jnp.float32)
    for di in range(ksize):
        for dj in range(ksize):
            s = di * w1_width + dj
            tap = x1[s:s + L, :].astype(jnp.bfloat16)
            z = z + jnp.dot(tap, w2_ref[di * ksize + dj],
                            preferred_element_type=jnp.float32)

    # MaxPool(4) over the valid conv2 positions (additive -1e30 mask on rows
    # outside the pool window), bias hoisted past the max, then ReLU.
    z = z + mask_ref[...]
    feat = jnp.maximum(jnp.max(z, axis=0, keepdims=True) + b2_ref[...], 0.0)
    feat = feat.astype(jnp.bfloat16)                     # (1, C) == torch flatten

    # Dueling head (NoisyLinear eval path). Pooled conv2 output is 1x1 spatial,
    # so head layer 1 is a single (C, hidden) matmul (no per-position loop).
    h = jnp.maximum(jnp.dot(feat, h1w_ref[...],
                            preferred_element_type=jnp.float32) + h1b_ref[...], 0.0)
    h = jnp.maximum(jnp.dot(h.astype(jnp.bfloat16), h2w_ref[...],
                            preferred_element_type=jnp.float32) + h2b_ref[...], 0.0)
    av = jnp.dot(h.astype(jnp.bfloat16), wav_ref[...],
                 preferred_element_type=jnp.float32) + bav_ref[...]   # (1, AVPAD)
    adv = av[:, :n_actions]
    val = av[:, n_actions:n_actions + 1]
    # Lane-dense (1, 128) unmasked store; only the first n_actions lanes matter.
    o_ref[...] = av + val - jnp.mean(adv, axis=1, keepdims=True)


# ---------------------------------------------------------------------------
# Full DQN forward: one fused pallas_call, grid over the batch.
# ---------------------------------------------------------------------------
def dqn_forward(x_nchw, p):
    pool, ks = POOL, KSIZE
    x = jnp.transpose(x_nchw.astype(jnp.float32), (0, 2, 3, 1))   # NCHW -> NHWC
    B, H, W, Cin = x.shape
    Cout = p['conv1_w'].shape[-1]
    hidden = p['head1_w'].shape[1]
    A = p['adv_w'].shape[1]

    H1, W1 = (H - ks + 1) // pool, (W - ks + 1) // pool   # conv1+pool spatial
    H2, W2 = H1 - ks + 1, W1 - ks + 1                      # conv2 spatial
    if H2 // pool != 1 or W2 // pool != 1:
        # TODO(synk): generalize to >1x1 pooled conv2 output (tiled conv2 pool
        # + a single (C*P, hidden) head-1 matmul in torch channel-major order).
        raise NotImplementedError("fused kernel expects a 1x1 pooled conv2 output")

    np1 = H1 * W1
    L = _round_up((pool - 1) * W1 + pool, 8)    # conv2 rows covering the pool window
    s_max = (ks - 1) * (W1 + 1)                 # largest tap row shift
    npad = _round_up(max(np1, s_max + L), 8)    # 8-aligned pooled-position rows

    patches, _ = _conv1_patches_tap_major(x, ks, pool, npad)
    patches = patches.astype(jnp.bfloat16)

    # Additive pool mask: 0 inside the 4x4 pool window, -1e30 elsewhere.
    m = jnp.arange(L)
    pool_mask = jnp.where((m // W1 < pool) & (m % W1 < pool), 0.0, -1e30)
    pool_mask = pool_mask.astype(jnp.float32).reshape(L, 1)

    w1 = p['conv1_w'].reshape(ks * ks * Cin, Cout).astype(jnp.bfloat16)
    w2 = p['conv2_w'].reshape(ks * ks, Cout, Cout).astype(jnp.bfloat16)
    h1w = p['head1_w'].astype(jnp.bfloat16)
    h2w = p['head2_w'].astype(jnp.bfloat16)
    wav = jnp.zeros((hidden, AVPAD), jnp.float32)
    wav = wav.at[:, :A].set(p['adv_w']).at[:, A:A + 1].set(p['val_w'])
    wav = wav.astype(jnp.bfloat16)
    bav = jnp.zeros((1, AVPAD), jnp.float32)
    bav = bav.at[:, :A].set(p['adv_b']).at[:, A:A + 1].set(p['val_b'])

    kern = functools.partial(_dqn_kernel, pool=pool, ksize=ks, w1_width=W1,
                             n_actions=A)

    def full(a):                       # whole-array block, resident across steps
        return pl.BlockSpec(a.shape, lambda b: (0,) * a.ndim)

    out = pl.pallas_call(
        kern,
        out_shape=jax.ShapeDtypeStruct((B, 1, AVPAD), jnp.float32),
        grid=(B,),
        in_specs=[
            pl.BlockSpec((None, pool * pool * npad, ks * ks * Cin),
                         lambda b: (b, 0, 0)),            # per-image patches
            full(pool_mask),
            full(w1), full(p['conv1_b']),
            full(w2), full(p['conv2_b']),
            full(h1w), full(p['head1_b']),
            full(h2w), full(p['head2_b']),
            full(wav), full(bav),
        ],
        out_specs=pl.BlockSpec((None, 1, AVPAD), lambda b: (b, 0, 0)),
        compiler_params=pltpu.CompilerParams(
            dimension_semantics=("parallel",),   # v7x: shard batch across both TCs
        ),
    )(patches, pool_mask, w1, p['conv1_b'], w2, p['conv2_b'],
      h1w, p['head1_b'], h2w, p['head2_b'], wav, bav)
    return out[:, 0, :A]


# ---------------------------------------------------------------------------
# Deterministic parameter init matching the torch module's shapes/distributions
# (conv & NoisyLinear w_mu: kaiming_uniform(a=sqrt(5)) == U(+-1/sqrt(fan_in));
#  NoisyLinear b_mu: zeros; sigma parameters unused on the eval path).
# ---------------------------------------------------------------------------
def init_params(key, obs_shape, hidden, n_actions):
    C, H, W = obs_shape

    def out_hw(s):
        s = (s - 2) // 4     # conv3x3 'valid' + maxpool(4), twice
        s = (s - 2) // 4
        return s

    conv_out = 64 * out_hw(H) * out_hw(W)
    ks = jax.random.split(key, 8)

    def kuni(k, shape, fan_in):
        bound = 1.0 / math.sqrt(fan_in)
        return jax.random.uniform(k, shape, jnp.float32, -bound, bound)

    return {
        'conv1_w': kuni(ks[0], (3, 3, C, 64), C * 9),
        'conv1_b': kuni(ks[1], (1, 64), C * 9),
        'conv2_w': kuni(ks[2], (3, 3, 64, 64), 64 * 9),
        'conv2_b': kuni(ks[3], (1, 64), 64 * 9),
        'head1_w': kuni(ks[4], (conv_out, hidden), conv_out),
        'head1_b': jnp.zeros((1, hidden), jnp.float32),
        'head2_w': kuni(ks[5], (hidden, hidden), hidden),
        'head2_b': jnp.zeros((1, hidden), jnp.float32),
        'adv_w': kuni(ks[6], (hidden, n_actions), hidden),
        'adv_b': jnp.zeros((1, n_actions), jnp.float32),
        'val_w': kuni(ks[7], (hidden, 1), hidden),
        'val_b': jnp.zeros((1, 1), jnp.float32),
    }


# ---------------------------------------------------------------------------
# Pure-JAX f32 reference (torch semantics: valid conv, floor max-pool, NCHW flatten)
# ---------------------------------------------------------------------------
def ref_forward(x_nchw, p):
    x = jnp.transpose(x_nchw.astype(jnp.float32), (0, 2, 3, 1))

    def block(x, w, b):
        y = jax.lax.conv_general_dilated(
            x, w, window_strides=(1, 1), padding='VALID',
            dimension_numbers=('NHWC', 'HWIO', 'NHWC')) + b.reshape(1, 1, 1, -1)
        B, Hc, Wc, Cc = y.shape
        Hp, Wp = Hc // 4, Wc // 4
        y = y[:, :Hp * 4, :Wp * 4, :].reshape(B, Hp, 4, Wp, 4, Cc).max(axis=(2, 4))
        return jnp.maximum(y, 0.0)

    x = block(x, p['conv1_w'], p['conv1_b'])
    x = block(x, p['conv2_w'], p['conv2_b'])
    B = x.shape[0]
    feat = jnp.transpose(x, (0, 3, 1, 2)).reshape(B, -1)   # torch .view(B, -1)
    h = jnp.maximum(feat @ p['head1_w'] + p['head1_b'], 0.0)
    h = jnp.maximum(h @ p['head2_w'] + p['head2_b'], 0.0)
    adv = h @ p['adv_w'] + p['adv_b']
    val = h @ p['val_w'] + p['val_b']
    return val + adv - jnp.mean(adv, axis=1, keepdims=True)


if __name__ == "__main__":
    # Smallest spatial size surviving two (conv3x3 + maxpool4) stages is 26.
    B, C, H, W = 2, 4, 26, 26
    hidden, n_actions = 32, 6

    key = jax.random.PRNGKey(0)
    kx, kp = jax.random.split(key)
    x = jax.random.normal(kx, (B, C, H, W), jnp.float32)
    params = init_params(kp, (C, H, W), hidden, n_actions)

    out = jax.jit(dqn_forward)(x, params)
    out = jax.block_until_ready(out)

    ref = ref_forward(x, params)
    assert out.shape == (B, n_actions), out.shape
    # bf16 matmul operands with f32 accumulation -> bf16-appropriate tolerance.
    if not bool(jnp.allclose(out, ref, atol=2e-2, rtol=2e-2)):
        raise AssertionError(f"mismatch vs reference: max abs err "
                             f"{float(jnp.max(jnp.abs(out - ref)))}")
    print("KERNEL_OK")
</pallas_src>

<mosaic_0001>
module attributes {stable_mosaic.version = 11 : i64} {
  func.func @_dqn_kernel(%arg0: i32, %arg1: memref<1x640x36xbf16, #tpu.memory_space<vmem>>, %arg2: memref<24x1xf32, #tpu.memory_space<vmem>>, %arg3: memref<36x64xbf16, #tpu.memory_space<vmem>>, %arg4: memref<1x64xf32, #tpu.memory_space<vmem>>, %arg5: memref<9x64x64xbf16, #tpu.memory_space<vmem>>, %arg6: memref<1x64xf32, #tpu.memory_space<vmem>>, %arg7: memref<64x32xbf16, #tpu.memory_space<vmem>>, %arg8: memref<1x32xf32, #tpu.memory_space<vmem>>, %arg9: memref<32x32xbf16, #tpu.memory_space<vmem>>, %arg10: memref<1x32xf32, #tpu.memory_space<vmem>>, %arg11: memref<32x128xbf16, #tpu.memory_space<vmem>>, %arg12: memref<1x128xf32, #tpu.memory_space<vmem>>, %arg13: memref<1x1x128xf32, #tpu.memory_space<vmem>>) attributes {dimension_semantics = [#tpu.dimension_semantics<parallel>], iteration_bounds = array<i64: 2>, scalar_prefetch = 0 : i64, scratch_operands = 0 : i64, tpu.core_type = #tpu.core_type<tc>, window_params = [{transform_indices = @transform_0, window_bounds = array<i64: 1, 640, 36>}, {pipeline_mode = #tpu.pipeline_mode<synchronous>, transform_indices = @transform_1, window_bounds = array<i64: 24, 1>}, {pipeline_mode = #tpu.pipeline_mode<synchronous>, transform_indices = @transform_2, window_bounds = array<i64: 36, 64>}, {pipeline_mode = #tpu.pipeline_mode<synchronous>, transform_indices = @transform_3, window_bounds = array<i64: 1, 64>}, {pipeline_mode = #tpu.pipeline_mode<synchronous>, transform_indices = @transform_4, window_bounds = array<i64: 9, 64, 64>}, {pipeline_mode = #tpu.pipeline_mode<synchronous>, transform_indices = @transform_5, window_bounds = array<i64: 1, 64>}, {pipeline_mode = #tpu.pipeline_mode<synchronous>, transform_indices = @transform_6, window_bounds = array<i64: 64, 32>}, {pipeline_mode = #tpu.pipeline_mode<synchronous>, transform_indices = @transform_7, window_bounds = array<i64: 1, 32>}, {pipeline_mode = #tpu.pipeline_mode<synchronous>, transform_indices = @transform_8, window_bounds = array<i64: 32, 32>}, {pipeline_mode = #tpu.pipeline_mode<synchronous>, transform_indices = @transform_9, window_bounds = array<i64: 1, 32>}, {pipeline_mode = #tpu.pipeline_mode<synchronous>, transform_indices = @transform_10, window_bounds = array<i64: 32, 128>}, {pipeline_mode = #tpu.pipeline_mode<synchronous>, transform_indices = @transform_11, window_bounds = array<i64: 1, 128>}, {transform_indices = @transform_12, window_bounds = array<i64: 1, 1, 128>}]} {
    %c0 = arith.constant 0 : index
    %c0_0 = arith.constant 0 : index
    %c0_1 = arith.constant 0 : index
    %0 = vector.load %arg1[%c0, %c0_0, %c0_1] : memref<1x640x36xbf16, #tpu.memory_space<vmem>>, vector<1x640x36xbf16>
    %1 = vector.shape_cast %0 : vector<1x640x36xbf16> to vector<640x36xbf16>
    %c0_2 = arith.constant 0 : index
    %c0_3 = arith.constant 0 : index
    %2 = vector.load %arg3[%c0_2, %c0_3] : memref<36x64xbf16, #tpu.memory_space<vmem>>, vector<36x64xbf16>
    %cst = arith.constant dense<0.000000e+00> : vector<640x64xf32>
    %3 = tpu.matmul %1, %2, %cst {dimension_numbers = #tpu.dot_dimension_numbers<[1], [0], [0], [1], [0, 0, 1, 1], [], []>} : vector<640x36xbf16>, vector<36x64xbf16>, vector<640x64xf32> -> vector<640x64xf32>
    %4 = vector.shape_cast %3 : vector<640x64xf32> to vector<16x40x64xf32>
    %cst_4 = arith.constant dense<0xFF800000> : vector<40x64xf32>
    %5 = vector.multi_reduction <maximumf>, %4, %cst_4 [0] : vector<16x40x64xf32> to vector<40x64xf32>
    %c0_5 = arith.constant 0 : index
    %c0_6 = arith.constant 0 : index
    %6 = vector.load %arg4[%c0_5, %c0_6] : memref<1x64xf32, #tpu.memory_space<vmem>>, vector<1x64xf32>
    %7 = vector.broadcast %6 : vector<1x64xf32> to vector<40x64xf32>
    %8 = arith.addf %5, %7 : vector<40x64xf32>
    %cst_7 = arith.constant 0.000000e+00 : f32
    %9 = vector.broadcast %cst_7 : f32 to vector<40x64xf32>
    %10 = arith.maximumf %8, %9 : vector<40x64xf32>
    %cst_8 = arith.constant 0.000000e+00 : f32
    %11 = vector.broadcast %cst_8 : f32 to vector<24x64xf32>
    %12 = vector.extract_strided_slice %10 {offsets = [0, 0], sizes = [24, 64], strides = [1, 1]} : vector<40x64xf32> to vector<24x64xf32>
    %13 = arith.truncf %12 : vector<24x64xf32> to vector<24x64xbf16>
    %c0_9 = arith.constant 0 : index
    %c0_10 = arith.constant 0 : index
    %c0_11 = arith.constant 0 : index
    %14 = vector.load %arg5[%c0_9, %c0_10, %c0_11] : memref<9x64x64xbf16, #tpu.memory_space<vmem>>, vector<1x64x64xbf16>
    %15 = vector.shape_cast %14 : vector<1x64x64xbf16> to vector<64x64xbf16>
    %cst_12 = arith.constant dense<0.000000e+00> : vector<24x64xf32>
    %16 = tpu.matmul %13, %15, %cst_12 {dimension_numbers = #tpu.dot_dimension_numbers<[1], [0], [0], [1], [0, 0, 1, 1], [], []>} : vector<24x64xbf16>, vector<64x64xbf16>, vector<24x64xf32> -> vector<24x64xf32>
    %17 = arith.addf %11, %16 : vector<24x64xf32>
    %18 = vector.extract_strided_slice %10 {offsets = [1, 0], sizes = [24, 64], strides = [1, 1]} : vector<40x64xf32> to vector<24x64xf32>
    %19 = arith.truncf %18 : vector<24x64xf32> to vector<24x64xbf16>
    %c1 = arith.constant 1 : index
    %c0_13 = arith.constant 0 : index
    %c0_14 = arith.constant 0 : index
    %20 = vector.load %arg5[%c1, %c0_13, %c0_14] : memref<9x64x64xbf16, #tpu.memory_space<vmem>>, vector<1x64x64xbf16>
    %21 = vector.shape_cast %20 : vector<1x64x64xbf16> to vector<64x64xbf16>
    %cst_15 = arith.constant dense<0.000000e+00> : vector<24x64xf32>
    %22 = tpu.matmul %19, %21, %cst_15 {dimension_numbers = #tpu.dot_dimension_numbers<[1], [0], [0], [1], [0, 0, 1, 1], [], []>} : vector<24x64xbf16>, vector<64x64xbf16>, vector<24x64xf32> -> vector<24x64xf32>
    %23 = arith.addf %17, %22 : vector<24x64xf32>
    %24 = vector.extract_strided_slice %10 {offsets = [2, 0], sizes = [24, 64], strides = [1, 1]} : vector<40x64xf32> to vector<24x64xf32>
    %25 = arith.truncf %24 : vector<24x64xf32> to vector<24x64xbf16>
    %c2 = arith.constant 2 : index
    %c0_16 = arith.constant 0 : index
    %c0_17 = arith.constant 0 : index
    %26 = vector.load %arg5[%c2, %c0_16, %c0_17] : memref<9x64x64xbf16, #tpu.memory_space<vmem>>, vector<1x64x64xbf16>
    %27 = vector.shape_cast %26 : vector<1x64x64xbf16> to vector<64x64xbf16>
    %cst_18 = arith.constant dense<0.000000e+00> : vector<24x64xf32>
    %28 = tpu.matmul %25, %27, %cst_18 {dimension_numbers = #tpu.dot_dimension_numbers<[1], [0], [0], [1], [0, 0, 1, 1], [], []>} : vector<24x64xbf16>, vector<64x64xbf16>, vector<24x64xf32> -> vector<24x64xf32>
    %29 = arith.addf %23, %28 : vector<24x64xf32>
    %30 = vector.extract_strided_slice %10 {offsets = [6, 0], sizes = [24, 64], strides = [1, 1]} : vector<40x64xf32> to vector<24x64xf32>
    %31 = arith.truncf %30 : vector<24x64xf32> to vector<24x64xbf16>
    %c3 = arith.constant 3 : index
    %c0_19 = arith.constant 0 : index
    %c0_20 = arith.constant 0 : index
    %32 = vector.load %arg5[%c3, %c0_19, %c0_20] : memref<9x64x64xbf16, #tpu.memory_space<vmem>>, vector<1x64x64xbf16>
    %33 = vector.shape_cast %32 : vector<1x64x64xbf16> to vector<64x64xbf16>
    %cst_21 = arith.constant dense<0.000000e+00> : vector<24x64xf32>
    %34 = tpu.matmul %31, %33, %cst_21 {dimension_numbers = #tpu.dot_dimension_numbers<[1], [0], [0], [1], [0, 0, 1, 1], [], []>} : vector<24x64xbf16>, vector<64x64xbf16>, vector<24x64xf32> -> vector<24x64xf32>
    %35 = arith.addf %29, %34 : vector<24x64xf32>
    %36 = vector.extract_strided_slice %10 {offsets = [7, 0], sizes = [24, 64], strides = [1, 1]} : vector<40x64xf32> to vector<24x64xf32>
    %37 = arith.truncf %36 : vector<24x64xf32> to vector<24x64xbf16>
    %c4 = arith.constant 4 : index
    %c0_22 = arith.constant 0 : index
    %c0_23 = arith.constant 0 : index
    %38 = vector.load %arg5[%c4, %c0_22, %c0_23] : memref<9x64x64xbf16, #tpu.memory_space<vmem>>, vector<1x64x64xbf16>
    %39 = vector.shape_cast %38 : vector<1x64x64xbf16> to vector<64x64xbf16>
    %cst_24 = arith.constant dense<0.000000e+00> : vector<24x64xf32>
    %40 = tpu.matmul %37, %39, %cst_24 {dimension_numbers = #tpu.dot_dimension_numbers<[1], [0], [0], [1], [0, 0, 1, 1], [], []>} : vector<24x64xbf16>, vector<64x64xbf16>, vector<24x64xf32> -> vector<24x64xf32>
    %41 = arith.addf %35, %40 : vector<24x64xf32>
    %42 = vector.extract_strided_slice %10 {offsets = [8, 0], sizes = [24, 64], strides = [1, 1]} : vector<40x64xf32> to vector<24x64xf32>
    %43 = arith.truncf %42 : vector<24x64xf32> to vector<24x64xbf16>
    %c5 = arith.constant 5 : index
    %c0_25 = arith.constant 0 : index
    %c0_26 = arith.constant 0 : index
    %44 = vector.load %arg5[%c5, %c0_25, %c0_26] : memref<9x64x64xbf16, #tpu.memory_space<vmem>>, vector<1x64x64xbf16>
    %45 = vector.shape_cast %44 : vector<1x64x64xbf16> to vector<64x64xbf16>
    %cst_27 = arith.constant dense<0.000000e+00> : vector<24x64xf32>
    %46 = tpu.matmul %43, %45, %cst_27 {dimension_numbers = #tpu.dot_dimension_numbers<[1], [0], [0], [1], [0, 0, 1, 1], [], []>} : vector<24x64xbf16>, vector<64x64xbf16>, vector<24x64xf32> -> vector<24x64xf32>
    %47 = arith.addf %41, %46 : vector<24x64xf32>
    %48 = vector.extract_strided_slice %10 {offsets = [12, 0], sizes = [24, 64], strides = [1, 1]} : vector<40x64xf32> to vector<24x64xf32>
    %49 = arith.truncf %48 : vector<24x64xf32> to vector<24x64xbf16>
    %c6 = arith.constant 6 : index
    %c0_28 = arith.constant 0 : index
    %c0_29 = arith.constant 0 : index
    %50 = vector.load %arg5[%c6, %c0_28, %c0_29] : memref<9x64x64xbf16, #tpu.memory_space<vmem>>, vector<1x64x64xbf16>
    %51 = vector.shape_cast %50 : vector<1x64x64xbf16> to vector<64x64xbf16>
    %cst_30 = arith.constant dense<0.000000e+00> : vector<24x64xf32>
    %52 = tpu.matmul %49, %51, %cst_30 {dimension_numbers = #tpu.dot_dimension_numbers<[1], [0], [0], [1], [0, 0, 1, 1], [], []>} : vector<24x64xbf16>, vector<64x64xbf16>, vector<24x64xf32> -> vector<24x64xf32>
    %53 = arith.addf %47, %52 : vector<24x64xf32>
    %54 = vector.extract_strided_slice %10 {offsets = [13, 0], sizes = [24, 64], strides = [1, 1]} : vector<40x64xf32> to vector<24x64xf32>
    %55 = arith.truncf %54 : vector<24x64xf32> to vector<24x64xbf16>
    %c7 = arith.constant 7 : index
    %c0_31 = arith.constant 0 : index
    %c0_32 = arith.constant 0 : index
    %56 = vector.load %arg5[%c7, %c0_31, %c0_32] : memref<9x64x64xbf16, #tpu.memory_space<vmem>>, vector<1x64x64xbf16>
    %57 = vector.shape_cast %56 : vector<1x64x64xbf16> to vector<64x64xbf16>
    %cst_33 = arith.constant dense<0.000000e+00> : vector<24x64xf32>
    %58 = tpu.matmul %55, %57, %cst_33 {dimension_numbers = #tpu.dot_dimension_numbers<[1], [0], [0], [1], [0, 0, 1, 1], [], []>} : vector<24x64xbf16>, vector<64x64xbf16>, vector<24x64xf32> -> vector<24x64xf32>
    %59 = arith.addf %53, %58 : vector<24x64xf32>
    %60 = vector.extract_strided_slice %10 {offsets = [14, 0], sizes = [24, 64], strides = [1, 1]} : vector<40x64xf32> to vector<24x64xf32>
    %61 = arith.truncf %60 : vector<24x64xf32> to vector<24x64xbf16>
    %c8 = arith.constant 8 : index
    %c0_34 = arith.constant 0 : index
    %c0_35 = arith.constant 0 : index
    %62 = vector.load %arg5[%c8, %c0_34, %c0_35] : memref<9x64x64xbf16, #tpu.memory_space<vmem>>, vector<1x64x64xbf16>
    %63 = vector.shape_cast %62 : vector<1x64x64xbf16> to vector<64x64xbf16>
    %cst_36 = arith.constant dense<0.000000e+00> : vector<24x64xf32>
    %64 = tpu.matmul %61, %63, %cst_36 {dimension_numbers = #tpu.dot_dimension_numbers<[1], [0], [0], [1], [0, 0, 1, 1], [], []>} : vector<24x64xbf16>, vector<64x64xbf16>, vector<24x64xf32> -> vector<24x64xf32>
    %65 = arith.addf %59, %64 : vector<24x64xf32>
    %c0_37 = arith.constant 0 : index
    %c0_38 = arith.constant 0 : index
    %66 = vector.load %arg2[%c0_37, %c0_38] : memref<24x1xf32, #tpu.memory_space<vmem>>, vector<24x1xf32>
    %67 = vector.broadcast %66 : vector<24x1xf32> to vector<24x64xf32>
    %68 = arith.addf %65, %67 : vector<24x64xf32>
    %cst_39 = arith.constant dense<0xFF800000> : vector<64xf32>
    %69 = vector.multi_reduction <maximumf>, %68, %cst_39 [0] : vector<24x64xf32> to vector<64xf32>
    %70 = vector.shape_cast %69 : vector<64xf32> to vector<1x64xf32>
    %c0_40 = arith.constant 0 : index
    %c0_41 = arith.constant 0 : index
    %71 = vector.load %arg6[%c0_40, %c0_41] : memref<1x64xf32, #tpu.memory_space<vmem>>, vector<1x64xf32>
    %72 = arith.addf %70, %71 : vector<1x64xf32>
    %cst_42 = arith.constant 0.000000e+00 : f32
    %73 = vector.broadcast %cst_42 : f32 to vector<1x64xf32>
    %74 = arith.maximumf %72, %73 : vector<1x64xf32>
    %75 = arith.truncf %74 : vector<1x64xf32> to vector<1x64xbf16>
    %c0_43 = arith.constant 0 : index
    %c0_44 = arith.constant 0 : index
    %76 = vector.load %arg7[%c0_43, %c0_44] : memref<64x32xbf16, #tpu.memory_space<vmem>>, vector<64x32xbf16>
    %cst_45 = arith.constant dense<0.000000e+00> : vector<1x32xf32>
    %77 = tpu.matmul %75, %76, %cst_45 {dimension_numbers = #tpu.dot_dimension_numbers<[1], [0], [0], [1], [0, 0, 1, 1], [], []>} : vector<1x64xbf16>, vector<64x32xbf16>, vector<1x32xf32> -> vector<1x32xf32>
    %c0_46 = arith.constant 0 : index
    %c0_47 = arith.constant 0 : index
    %78 = vector.load %arg8[%c0_46, %c0_47] : memref<1x32xf32, #tpu.memory_space<vmem>>, vector<1x32xf32>
    %79 = arith.addf %77, %78 : vector<1x32xf32>
    %cst_48 = arith.constant 0.000000e+00 : f32
    %80 = vector.broadcast %cst_48 : f32 to vector<1x32xf32>
    %81 = arith.maximumf %79, %80 : vector<1x32xf32>
    %82 = arith.truncf %81 : vector<1x32xf32> to vector<1x32xbf16>
    %c0_49 = arith.constant 0 : index
    %c0_50 = arith.constant 0 : index
    %83 = vector.load %arg9[%c0_49, %c0_50] : memref<32x32xbf16, #tpu.memory_space<vmem>>, vector<32x32xbf16>
    %cst_51 = arith.constant dense<0.000000e+00> : vector<1x32xf32>
    %84 = tpu.matmul %82, %83, %cst_51 {dimension_numbers = #tpu.dot_dimension_numbers<[1], [0], [0], [1], [0, 0, 1, 1], [], []>} : vector<1x32xbf16>, vector<32x32xbf16>, vector<1x32xf32> -> vector<1x32xf32>
    %c0_52 = arith.constant 0 : index
    %c0_53 = arith.constant 0 : index
    %85 = vector.load %arg10[%c0_52, %c0_53] : memref<1x32xf32, #tpu.memory_space<vmem>>, vector<1x32xf32>
    %86 = arith.addf %84, %85 : vector<1x32xf32>
    %cst_54 = arith.constant 0.000000e+00 : f32
    %87 = vector.broadcast %cst_54 : f32 to vector<1x32xf32>
    %88 = arith.maximumf %86, %87 : vector<1x32xf32>
    %89 = arith.truncf %88 : vector<1x32xf32> to vector<1x32xbf16>
    %c0_55 = arith.constant 0 : index
    %c0_56 = arith.constant 0 : index
    %90 = vector.load %arg11[%c0_55, %c0_56] : memref<32x128xbf16, #tpu.memory_space<vmem>>, vector<32x128xbf16>
    %cst_57 = arith.constant dense<0.000000e+00> : vector<1x128xf32>
    %91 = tpu.matmul %89, %90, %cst_57 {dimension_numbers = #tpu.dot_dimension_numbers<[1], [0], [0], [1], [0, 0, 1, 1], [], []>} : vector<1x32xbf16>, vector<32x128xbf16>, vector<1x128xf32> -> vector<1x128xf32>
    %c0_58 = arith.constant 0 : index
    %c0_59 = arith.constant 0 : index
    %92 = vector.load %arg12[%c0_58, %c0_59] : memref<1x128xf32, #tpu.memory_space<vmem>>, vector<1x128xf32>
    %93 = arith.addf %91, %92 : vector<1x128xf32>
    %94 = vector.extract_strided_slice %93 {offsets = [0, 0], sizes = [1, 6], strides = [1, 1]} : vector<1x128xf32> to vector<1x6xf32>
    %95 = vector.extract_strided_slice %93 {offsets = [0, 6], sizes = [1, 1], strides = [1, 1]} : vector<1x128xf32> to vector<1x1xf32>
    %96 = vector.broadcast %95 : vector<1x1xf32> to vector<1x128xf32>
    %97 = arith.addf %93, %96 : vector<1x128xf32>
    %cst_60 = arith.constant dense<0.000000e+00> : vector<1xf32>
    %98 = vector.multi_reduction <add>, %94, %cst_60 [1] : vector<1x6xf32> to vector<1xf32>
    %99 = vector.shape_cast %98 : vector<1xf32> to vector<1x1xf32>
    %cst_61 = arith.constant 6.000000e+00 : f32
    %100 = vector.broadcast %cst_61 : f32 to vector<1x1xf32>
    %101 = arith.divf %99, %100 : vector<1x1xf32>
    %102 = vector.broadcast %101 : vector<1x1xf32> to vector<1x128xf32>
    %103 = arith.subf %97, %102 : vector<1x128xf32>
    %c0_62 = arith.constant 0 : index
    %c0_63 = arith.constant 0 : index
    %c0_64 = arith.constant 0 : index
    %104 = vector.load %arg13[%c0_62, %c0_63, %c0_64] : memref<1x1x128xf32, #tpu.memory_space<vmem>>, vector<1x1x128xf32>
    %105 = vector.shape_cast %104 : vector<1x1x128xf32> to vector<1x128xf32>
    %106 = vector.shape_cast %103 : vector<1x128xf32> to vector<1x1x128xf32>
    tpu.vector_store %arg13[%c0_62, %c0_63, %c0_64], %106 {strides = array<i32>} : memref<1x1x128xf32, #tpu.memory_space<vmem>>, vector<1x1x128xf32>,
    return
  }
  func.func @transform_0(%arg0: i32) -> (i32, i32, i32) {
    %c0_i32 = arith.constant 0 : i32
    %c0_i32_0 = arith.constant 0 : i32
    %c0_i32_1 = arith.constant 0 : i32
    return %arg0, %c0_i32, %c0_i32_0 : i32, i32, i32
  }
  func.func @transform_1(%arg0: i32) -> (i32, i32) {
    %c0_i32 = arith.constant 0 : i32
    %c0_i32_0 = arith.constant 0 : i32
    %c0_i32_1 = arith.constant 0 : i32
    return %c0_i32, %c0_i32_0 : i32, i32
  }
  func.func @transform_2(%arg0: i32) -> (i32, i32) {
    %c0_i32 = arith.constant 0 : i32
    %c0_i32_0 = arith.constant 0 : i32
    %c0_i32_1 = arith.constant 0 : i32
    return %c0_i32, %c0_i32_0 : i32, i32
  }
  func.func @transform_3(%arg0: i32) -> (i32, i32) {
    %c0_i32 = arith.constant 0 : i32
    %c0_i32_0 = arith.constant 0 : i32
    %c0_i32_1 = arith.constant 0 : i32
    return %c0_i32, %c0_i32_0 : i32, i32
  }
  func.func @transform_4(%arg0: i32) -> (i32, i32, i32) {
    %c0_i32 = arith.constant 0 : i32
    %c0_i32_0 = arith.constant 0 : i32
    %c0_i32_1 = arith.constant 0 : i32
    %c0_i32_2 = arith.constant 0 : i32
    return %c0_i32, %c0_i32_0, %c0_i32_1 : i32, i32, i32
  }
  func.func @transform_5(%arg0: i32) -> (i32, i32) {
    %c0_i32 = arith.constant 0 : i32
    %c0_i32_0 = arith.constant 0 : i32
    %c0_i32_1 = arith.constant 0 : i32
    return %c0_i32, %c0_i32_0 : i32, i32
  }
  func.func @transform_6(%arg0: i32) -> (i32, i32) {
    %c0_i32 = arith.constant 0 : i32
    %c0_i32_0 = arith.constant 0 : i32
    %c0_i32_1 = arith.constant 0 : i32
    return %c0_i32, %c0_i32_0 : i32, i32
  }
  func.func @transform_7(%arg0: i32) -> (i32, i32) {
    %c0_i32 = arith.constant 0 : i32
    %c0_i32_0 = arith.constant 0 : i32
    %c0_i32_1 = arith.constant 0 : i32
    return %c0_i32, %c0_i32_0 : i32, i32
  }
  func.func @transform_8(%arg0: i32) -> (i32, i32) {
    %c0_i32 = arith.constant 0 : i32
    %c0_i32_0 = arith.constant 0 : i32
    %c0_i32_1 = arith.constant 0 : i32
    return %c0_i32, %c0_i32_0 : i32, i32
  }
  func.func @transform_9(%arg0: i32) -> (i32, i32) {
    %c0_i32 = arith.constant 0 : i32
    %c0_i32_0 = arith.constant 0 : i32
    %c0_i32_1 = arith.constant 0 : i32
    return %c0_i32, %c0_i32_0 : i32, i32
  }
  func.func @transform_10(%arg0: i32) -> (i32, i32) {
    %c0_i32 = arith.constant 0 : i32
    %c0_i32_0 = arith.constant 0 : i32
    %c0_i32_1 = arith.constant 0 : i32
    return %c0_i32, %c0_i32_0 : i32, i32
  }
  func.func @transform_11(%arg0: i32) -> (i32, i32) {
    %c0_i32 = arith.constant 0 : i32
    %c0_i32_0 = arith.constant 0 : i32
    %c0_i32_1 = arith.constant 0 : i32
    return %c0_i32, %c0_i32_0 : i32, i32
  }
  func.func @transform_12(%arg0: i32) -> (i32, i32, i32) {
    %c0_i32 = arith.constant 0 : i32
    %c0_i32_0 = arith.constant 0 : i32
    %c0_i32_1 = arith.constant 0 : i32
    return %arg0, %c0_i32, %c0_i32_0 : i32, i32, i32
  }
}

</mosaic_0001>

<llo_original>
// kernel: dqn_forward.1
$region0: #{dqn_forward.1}
  #allocation0 [shape = 'u32[]', space=smem, size = 0x4, offset = 0x4, fixed_abs, tag = 'smem constant byte address 0x4 - core index']
  #allocation1 [shape = 'u32[144,128]{1,0:T(1,128)}', space=vmem, size = 0x12000, scoped, tag = 'internal scratch']
  %s0 = inlined_call_operand.vmem [shape: bf16[2,640,36], index: 0, kind: input, shape index: {}]
  %s1 = inlined_call_operand.vmem [shape: f32[24,1], index: 1, kind: input, shape index: {}]
  %s2 = inlined_call_operand.vmem [shape: bf16[36,64], index: 2, kind: input, shape index: {}]
  %s3 = inlined_call_operand.vmem [shape: f32[1,64], index: 3, kind: input, shape index: {}]
  %s4 = inlined_call_operand.vmem [shape: bf16[9,64,64], index: 4, kind: input, shape index: {}]
  %s5 = inlined_call_operand.vmem [shape: f32[1,64], index: 5, kind: input, shape index: {}]
  %s6 = inlined_call_operand.vmem [shape: bf16[64,32], index: 6, kind: input, shape index: {}]
  %s7 = inlined_call_operand.vmem [shape: f32[1,32], index: 7, kind: input, shape index: {}]
  %s8 = inlined_call_operand.vmem [shape: bf16[32,32], index: 8, kind: input, shape index: {}]
  %s9 = inlined_call_operand.vmem [shape: f32[1,32], index: 9, kind: input, shape index: {}]
  %s10 = inlined_call_operand.vmem [shape: bf16[32,128], index: 10, kind: input, shape index: {}]
  %s11 = inlined_call_operand.vmem [shape: f32[1,128], index: 11, kind: input, shape index: {}]
  %s12 = inlined_call_operand.hbm [shape: f32[2,1,128], index: 12, kind: output, shape index: {}]
  %s13 = sld [smem:[#allocation0]]
  $region81: #{dqn_forward.1} parent=0
    _
  %s15 = ssub.s32 1, %s13
  %s16 = scalar_select 0, %s15, %s13
  $region1: #{dqn_forward.1} parent=0
    #allocation2 [shape = 'u8[1024]{0}', space=vmem, size = 0x400, scoped, tag = 'output window, operand 0']
    #allocation3 [shape = 's32[2]{0}', space=sflag, size = 0x8, scoped, tag = 'scoped memory for dqn_forward.1']
    %17 = vsyncpa [#allocation3], 0
    %s18 = scalar_lea.sflag [#allocation3], 1
    %19 = vsyncpa %s18, 0
    loop: start=0, step=1, limit=4
    $region2: #{dqn_forward.1} parent=1 // loop_pre_header
      _
    $region3: #{dqn_forward.1} parent=1 // loop_header
      %s21 = sphi 0, %s25
      %p22 = scmp.ge.s32.totalorder %s21, 4
      %s31 = sphi 0, %s33
      %s34 = sphi 0, %s31
      %s35 = sphi 0, %s34
      %s51 = sphi 0, %s35
      %s55 = sphi 0, %s55
      %s57 = sphi 0, %s55
      %s58 = sphi 0, %s57
      %s72 = sphi 0, %s58
      %s76 = sphi 0, %s76
      %s78 = sphi 0, %s76
      %s79 = sphi 0, %s78
      %s93 = sphi 0, %s79
      %s97 = sphi 0, %s97
      %s99 = sphi 0, %s97
      %s100 = sphi 0, %s99
      %s114 = sphi 0, %s100
      %s118 = sphi 0, %s118
      %s120 = sphi 0, %s118
      %s121 = sphi 0, %s120
      %s135 = sphi 0, %s121
      %s139 = sphi 0, %s139
      %s141 = sphi 0, %s139
      %s142 = sphi 0, %s141
      %s156 = sphi 0, %s142
      %s160 = sphi 0, %s160
      %s162 = sphi 0, %s160
      %s163 = sphi 0, %s162
      %s177 = sphi 0, %s163
      %s181 = sphi 0, %s181
      %s183 = sphi 0, %s181
      %s184 = sphi 0, %s183
      %s198 = sphi 0, %s184
      %s202 = sphi 0, %s202
      %s204 = sphi 0, %s202
      %s205 = sphi 0, %s204
      %s219 = sphi 0, %s205
      %s223 = sphi 0, %s223
      %s225 = sphi 0, %s223
      %s226 = sphi 0, %s225
      %s240 = sphi 0, %s226
      %s244 = sphi 0, %s244
      %s246 = sphi 0, %s244
      %s247 = sphi 0, %s246
      %s261 = sphi 0, %s247
      %s265 = sphi 0, %s265
      %s267 = sphi 0, %s265
      %s268 = sphi 0, %s267
      %s282 = sphi 0, %s268
      %s288 = sphi 0, %s290
      %s291 = sphi 0, %s288
      %s292 = sphi 0, %s291
      %s308 = sphi 0, %s292
    $region4: #{dqn_forward.1} parent=1 // loop_header_branch
      %24 = sbr.rel (%p22) target = $region8
    $region5: #{dqn_forward.1} parent=1 // loop_body
      %s26 = ssub.s32 %s21, 1
      %s27 = ssub.s32 %s21, 2
      %s28 = sadd.s32 %s21, 1
      %s29 = ssub.s32 %s21, %s28
      %p30 = scmp.eq.s32.totalorder %s29, 0
      %s32 = sadd.s32 %s31, 1
      %s33 = scalar_select %p30, %s31, %s32
      %p36 = pneg %p30
      %p37 = scmp.eq.s32.totalorder %s21, 1
      %p38 = por %p36, %p37
      %p39 = scmp.ne.s32.totalorder %s31, %s34
      %p40 = scmp.eq.s32.totalorder %s21, 0
      %p41 = por %p39, %p40
      %p42 = scmp.ne.s32.totalorder %s31, %s34
      %p43 = scmp.eq.s32.totalorder %s26, 1
      %p44 = por %p42, %p43
      %p45 = scmp.ne.s32.totalorder %s34, %s35
      %p46 = scmp.eq.s32.totalorder %s26, 0
      %p47 = por %p45, %p46
      %p48 = scmp.ne.s32.totalorder %s34, %s35
      %p49 = scmp.eq.s32.totalorder %s27, 1
      %p50 = por %p48, %p49
      %p52 = scmp.ne.s32.totalorder %s35, %s51
      %p53 = scmp.eq.s32.totalorder %s27, 0
      %p54 = por %p52, %p53
      %s56 = sadd.s32 %s55, 1
      %p59 = scmp.eq.s32.totalorder %s21, 1
      %p60 = scmp.ne.s32.totalorder %s55, %s57
      %p61 = scmp.eq.s32.totalorder %s21, 0
      %p62 = por %p60, %p61
      %p63 = scmp.ne.s32.totalorder %s55, %s57
      %p64 = scmp.eq.s32.totalorder %s26, 1
      %p65 = por %p63, %p64
      %p66 = scmp.ne.s32.totalorder %s57, %s58
      %p67 = scmp.eq.s32.totalorder %s26, 0
      %p68 = por %p66, %p67
      %p69 = scmp.ne.s32.totalorder %s57, %s58
      %p70 = scmp.eq.s32.totalorder %s27, 1
      %p71 = por %p69, %p70
      %p73 = scmp.ne.s32.totalorder %s58, %s72
      %p74 = scmp.eq.s32.totalorder %s27, 0
      %p75 = por %p73, %p74
      %s77 = sadd.s32 %s76, 1
      %p80 = scmp.eq.s32.totalorder %s21, 1
      %p81 = scmp.ne.s32.totalorder %s76, %s78
      %p82 = scmp.eq.s32.totalorder %s21, 0
      %p83 = por %p81, %p82
      %p84 = scmp.ne.s32.totalorder %s76, %s78
      %p85 = scmp.eq.s32.totalorder %s26, 1
      %p86 = por %p84, %p85
      %p87 = scmp.ne.s32.totalorder %s78, %s79
      %p88 = scmp.eq.s32.totalorder %s26, 0
      %p89 = por %p87, %p88
      %p90 = scmp.ne.s32.totalorder %s78, %s79
      %p91 = scmp.eq.s32.totalorder %s27, 1
      %p92 = por %p90, %p91
      %p94 = scmp.ne.s32.totalorder %s79, %s93
      %p95 = scmp.eq.s32.totalorder %s27, 0
      %p96 = por %p94, %p95
      %s98 = sadd.s32 %s97, 1
      %p101 = scmp.eq.s32.totalorder %s21, 1
      %p102 = scmp.ne.s32.totalorder %s97, %s99
      %p103 = scmp.eq.s32.totalorder %s21, 0
      %p104 = por %p102, %p103
      %p105 = scmp.ne.s32.totalorder %s97, %s99
      %p106 = scmp.eq.s32.totalorder %s26, 1
      %p107 = por %p105, %p106
      %p108 = scmp.ne.s32.totalorder %s99, %s100
      %p109 = scmp.eq.s32.totalorder %s26, 0
      %p110 = por %p108, %p109
      %p111 = scmp.ne.s32.totalorder %s99, %s100
      %p112 = scmp.eq.s32.totalorder %s27, 1
      %p113 = por %p111, %p112
      %p115 = scmp.ne.s32.totalorder %s100, %s114
      %p116 = scmp.eq.s32.totalorder %s27, 0
      %p117 = por %p115, %p116
      %s119 = sadd.s32 %s118, 1
      %p122 = scmp.eq.s32.totalorder %s21, 1
      %p123 = scmp.ne.s32.totalorder %s118, %s120
      %p124 = scmp.eq.s32.totalorder %s21, 0
      %p125 = por %p123, %p124
      %p126 = scmp.ne.s32.totalorder %s118, %s120
      %p127 = scmp.eq.s32.totalorder %s26, 1
      %p128 = por %p126, %p127
      %p129 = scmp.ne.s32.totalorder %s120, %s121
      %p130 = scmp.eq.s32.totalorder %s26, 0
      %p131 = por %p129, %p130
      %p132 = scmp.ne.s32.totalorder %s120, %s121
      %p133 = scmp.eq.s32.totalorder %s27, 1
      %p134 = por %p132, %p133
      %p136 = scmp.ne.s32.totalorder %s121, %s135
      %p137 = scmp.eq.s32.totalorder %s27, 0
      %p138 = por %p136, %p137
      %s140 = sadd.s32 %s139, 1
      %p143 = scmp.eq.s32.totalorder %s21, 1
      %p144 = scmp.ne.s32.totalorder %s139, %s141
      %p145 = scmp.eq.s32.totalorder %s21, 0
      %p146 = por %p144, %p145
      %p147 = scmp.ne.s32.totalorder %s139, %s141
      %p148 = scmp.eq.s32.totalorder %s26, 1
      %p149 = por %p147, %p148
      %p150 = scmp.ne.s32.totalorder %s141, %s142
      %p151 = scmp.eq.s32.totalorder %s26, 0
      %p152 = por %p150, %p151
      %p153 = scmp.ne.s32.totalorder %s141, %s142
      %p154 = scmp.eq.s32.totalorder %s27, 1
      %p155 = por %p153, %p154
      %p157 = scmp.ne.s32.totalorder %s142, %s156
      %p158 = scmp.eq.s32.totalorder %s27, 0
      %p159 = por %p157, %p158
      %s161 = sadd.s32 %s160, 1
      %p164 = scmp.eq.s32.totalorder %s21, 1
      %p165 = scmp.ne.s32.totalorder %s160, %s162
      %p166 = scmp.eq.s32.totalorder %s21, 0
      %p167 = por %p165, %p166
      %p168 = scmp.ne.s32.totalorder %s160, %s162
      %p169 = scmp.eq.s32.totalorder %s26, 1
      %p170 = por %p168, %p169
      %p171 = scmp.ne.s32.totalorder %s162, %s163
      %p172 = scmp.eq.s32.totalorder %s26, 0
      %p173 = por %p171, %p172
      %p174 = scmp.ne.s32.totalorder %s162, %s163
      %p175 = scmp.eq.s32.totalorder %s27, 1
      %p176 = por %p174, %p175
      %p178 = scmp.ne.s32.totalorder %s163, %s177
      %p179 = scmp.eq.s32.totalorder %s27, 0
      %p180 = por %p178, %p179
      %s182 = sadd.s32 %s181, 1
      %p185 = scmp.eq.s32.totalorder %s21, 1
      %p186 = scmp.ne.s32.totalorder %s181, %s183
      %p187 = scmp.eq.s32.totalorder %s21, 0
      %p188 = por %p186, %p187
      %p189 = scmp.ne.s32.totalorder %s181, %s183
      %p190 = scmp.eq.s32.totalorder %s26, 1
      %p191 = por %p189, %p190
      %p192 = scmp.ne.s32.totalorder %s183, %s184
      %p193 = scmp.eq.s32.totalorder %s26, 0
      %p194 = por %p192, %p193
      %p195 = scmp.ne.s32.totalorder %s183, %s184
      %p196 = scmp.eq.s32.totalorder %s27, 1
      %p197 = por %p195, %p196
      %p199 = scmp.ne.s32.totalorder %s184, %s198
      %p200 = scmp.eq.s32.totalorder %s27, 0
      %p201 = por %p199, %p200
      %s203 = sadd.s32 %s202, 1
      %p206 = scmp.eq.s32.totalorder %s21, 1
      %p207 = scmp.ne.s32.totalorder %s202, %s204
      %p208 = scmp.eq.s32.totalorder %s21, 0
      %p209 = por %p207, %p208
      %p210 = scmp.ne.s32.totalorder %s202, %s204
      %p211 = scmp.eq.s32.totalorder %s26, 1
      %p212 = por %p210, %p211
      %p213 = scmp.ne.s32.totalorder %s204, %s205
      %p214 = scmp.eq.s32.totalorder %s26, 0
      %p215 = por %p213, %p214
      %p216 = scmp.ne.s32.totalorder %s204, %s205
      %p217 = scmp.eq.s32.totalorder %s27, 1
      %p218 = por %p216, %p217
      %p220 = scmp.ne.s32.totalorder %s205, %s219
      %p221 = scmp.eq.s32.totalorder %s27, 0
      %p222 = por %p220, %p221
      %s224 = sadd.s32 %s223, 1
      %p227 = scmp.eq.s32.totalorder %s21, 1
      %p228 = scmp.ne.s32.totalorder %s223, %s225
      %p229 = scmp.eq.s32.totalorder %s21, 0
      %p230 = por %p228, %p229
      %p231 = scmp.ne.s32.totalorder %s223, %s225
      %p232 = scmp.eq.s32.totalorder %s26, 1
      %p233 = por %p231, %p232
      %p234 = scmp.ne.s32.totalorder %s225, %s226
      %p235 = scmp.eq.s32.totalorder %s26, 0
      %p236 = por %p234, %p235
      %p237 = scmp.ne.s32.totalorder %s225, %s226
      %p238 = scmp.eq.s32.totalorder %s27, 1
      %p239 = por %p237, %p238
      %p241 = scmp.ne.s32.totalorder %s226, %s240
      %p242 = scmp.eq.s32.totalorder %s27, 0
      %p243 = por %p241, %p242
      %s245 = sadd.s32 %s244, 1
      %p248 = scmp.eq.s32.totalorder %s21, 1
      %p249 = scmp.ne.s32.totalorder %s244, %s246
      %p250 = scmp.eq.s32.totalorder %s21, 0
      %p251 = por %p249, %p250
      %p252 = scmp.ne.s32.totalorder %s244, %s246
      %p253 = scmp.eq.s32.totalorder %s26, 1
      %p254 = por %p252, %p253
      %p255 = scmp.ne.s32.totalorder %s246, %s247
      %p256 = scmp.eq.s32.totalorder %s26, 0
      %p257 = por %p255, %p256
      %p258 = scmp.ne.s32.totalorder %s246, %s247
      %p259 = scmp.eq.s32.totalorder %s27, 1
      %p260 = por %p258, %p259
      %p262 = scmp.ne.s32.totalorder %s247, %s261
      %p263 = scmp.eq.s32.totalorder %s27, 0
      %p264 = por %p262, %p263
      %s266 = sadd.s32 %s265, 1
      %p269 = scmp.eq.s32.totalorder %s21, 1
      %p270 = scmp.ne.s32.totalorder %s265, %s267
      %p271 = scmp.eq.s32.totalorder %s21, 0
      %p272 = por %p270, %p271
      %p273 = scmp.ne.s32.totalorder %s265, %s267
      %p274 = scmp.eq.s32.totalorder %s26, 1
      %p275 = por %p273, %p274
      %p276 = scmp.ne.s32.totalorder %s267, %s268
      %p277 = scmp.eq.s32.totalorder %s26, 0
      %p278 = por %p276, %p277
      %p279 = scmp.ne.s32.totalorder %s267, %s268
      %p280 = scmp.eq.s32.totalorder %s27, 1
      %p281 = por %p279, %p280
      %p283 = scmp.ne.s32.totalorder %s268, %s282
      %p284 = scmp.eq.s32.totalorder %s27, 0
      %p285 = por %p283, %p284
      %s286 = ssub.s32 %s21, %s28
      %p287 = scmp.eq.s32.totalorder %s286, 0
      %s289 = sadd.s32 %s288, 1
      %s290 = scalar_select %p287, %s288, %s289
      %p293 = pneg %p287
      %p294 = scmp.eq.s32.totalorder %s21, 1
      %p295 = por %p293, %p294
      %p296 = scmp.ne.s32.totalorder %s288, %s291
      %p297 = scmp.eq.s32.totalorder %s21, 0
      %p298 = por %p296, %p297
      %p299 = scmp.ne.s32.totalorder %s288, %s291
      %p300 = scmp.eq.s32.totalorder %s26, 1
      %p301 = por %p299, %p300
      %p302 = scmp.ne.s32.totalorder %s291, %s292
      %p303 = scmp.eq.s32.totalorder %s26, 0
      %p304 = por %p302, %p303
      %p305 = scmp.ne.s32.totalorder %s291, %s292
      %p306 = scmp.eq.s32.totalorder %s27, 1
      %p307 = por %p305, %p306
      %p309 = scmp.ne.s32.totalorder %s292, %s308
      %p310 = scmp.eq.s32.totalorder %s27, 0
      %p311 = por %p309, %p310
      %p312 = scmp.le.s32.totalorder 1, %s21
      %p313 = scmp.lt.s32.totalorder %s21, 3
      %p314 = pnand %p312, %p313
      %p315 = pneg %p314
      // Predicated region
      $region9: #{dqn_forward.1} parent=5 // pred_check
        _
      $region10: #{dqn_forward.1} parent=5 // pred_check_branch
        %317 = sbr.rel (%p314) target = $region12
      $region11: #{dqn_forward.1} parent=5 // pred_region
        %s318 = ssub.s32 %s21, 1
        // Predicated region
        $region13: #{dqn_forward.1} parent=11 // pred_check
          %p319 = pneg %p68
        $region14: #{dqn_forward.1} parent=11 // pred_check_branch
          %321 = sbr.rel (%p319) target = $region16
        $region15: #{dqn_forward.1} parent=11 // pred_region
          _
        $region16: #{dqn_forward.1} parent=11 // pred_fallthru
          _
        // Predicated region
        $region17: #{dqn_forward.1} parent=11 // pred_check
          %p322 = pneg %p89
        $region18: #{dqn_forward.1} parent=11 // pred_check_branch
          %324 = sbr.rel (%p322) target = $region20
        $region19: #{dqn_forward.1} parent=11 // pred_region
          _
        $region20: #{dqn_forward.1} parent=11 // pred_fallthru
          _
        // Predicated region
        $region21: #{dqn_forward.1} parent=11 // pred_check
          %p325 = pneg %p110
        $region22: #{dqn_forward.1} parent=11 // pred_check_branch
          %327 = sbr.rel (%p325) target = $region24
        $region23: #{dqn_forward.1} parent=11 // pred_region
          _
        $region24: #{dqn_forward.1} parent=11 // pred_fallthru
          _
        // Predicated region
        $region25: #{dqn_forward.1} parent=11 // pred_check
          %p328 = pneg %p131
        $region26: #{dqn_forward.1} parent=11 // pred_check_branch
          %330 = sbr.rel (%p328) target = $region28
        $region27: #{dqn_forward.1} parent=11 // pred_region
          _
        $region28: #{dqn_forward.1} parent=11 // pred_fallthru
          _
        // Predicated region
        $region29: #{dqn_forward.1} parent=11 // pred_check
          %p331 = pneg %p152
        $region30: #{dqn_forward.1} parent=11 // pred_check_branch
          %333 = sbr.rel (%p331) target = $region32
        $region31: #{dqn_forward.1} parent=11 // pred_region
          _
        $region32: #{dqn_forward.1} parent=11 // pred_fallthru
          _
        // Predicated region
        $region33: #{dqn_forward.1} parent=11 // pred_check
          %p334 = pneg %p173
        $region34: #{dqn_forward.1} parent=11 // pred_check_branch
          %336 = sbr.rel (%p334) target = $region36
        $region35: #{dqn_forward.1} parent=11 // pred_region
          _
        $region36: #{dqn_forward.1} parent=11 // pred_fallthru
          _
        // Predicated region
        $region37: #{dqn_forward.1} parent=11 // pred_check
          %p337 = pneg %p194
        $region38: #{dqn_forward.1} parent=11 // pred_check_branch
          %339 = sbr.rel (%p337) target = $region40
        $region39: #{dqn_forward.1} parent=11 // pred_region
          _
        $region40: #{dqn_forward.1} parent=11 // pred_fallthru
          _
        // Predicated region
        $region41: #{dqn_forward.1} parent=11 // pred_check
          %p340 = pneg %p215
        $region42: #{dqn_forward.1} parent=11 // pred_check_branch
          %342 = sbr.rel (%p340) target = $region44
        $region43: #{dqn_forward.1} parent=11 // pred_region
          _
        $region44: #{dqn_forward.1} parent=11 // pred_fallthru
          _
        // Predicated region
        $region45: #{dqn_forward.1} parent=11 // pred_check
          %p343 = pneg %p236
        $region46: #{dqn_forward.1} parent=11 // pred_check_branch
          %345 = sbr.rel (%p343) target = $region48
        $region47: #{dqn_forward.1} parent=11 // pred_region
          _
        $region48: #{dqn_forward.1} parent=11 // pred_fallthru
          _
        // Predicated region
        $region49: #{dqn_forward.1} parent=11 // pred_check
          %p346 = pneg %p257
        $region50: #{dqn_forward.1} parent=11 // pred_check_branch
          %348 = sbr.rel (%p346) target = $region52
        $region51: #{dqn_forward.1} parent=11 // pred_region
          _
        $region52: #{dqn_forward.1} parent=11 // pred_fallthru
          _
        // Predicated region
        $region53: #{dqn_forward.1} parent=11 // pred_check
          %p349 = pneg %p278
        $region54: #{dqn_forward.1} parent=11 // pred_check_branch
          %351 = sbr.rel (%p349) target = $region56
        $region55: #{dqn_forward.1} parent=11 // pred_region
          _
        $region56: #{dqn_forward.1} parent=11 // pred_fallthru
          _
      $region12: #{dqn_forward.1} parent=5 // pred_fallthru
        _
      %p352 = scmp.lt.s32.totalorder %s21, 2
      // Predicated region
      $region57: #{dqn_forward.1} parent=5 // pred_check
        %p353 = pneg %p352
      $region58: #{dqn_forward.1} parent=5 // pred_check_branch
        %355 = sbr.rel (%p353) target = $region60
      $region59: #{dqn_forward.1} parent=5 // pred_region
        // Predicated region
        $region61: #{dqn_forward.1} parent=59 // pred_check
          %p356 = pneg %p41
        $region62: #{dqn_forward.1} parent=59 // pred_check_branch
          %358 = sbr.rel (%p356) target = $region64
        $region63: #{dqn_forward.1} parent=59 // pred_region
          %p359 = scmp.lt.s32.totalorder %s21, 1
          %s360 = scalar_select %p359, %s21, 1
          %s361 = smul.addr %s360, 80
          %s362 = smul.addr %s361, 4
          %s363 = scalar_lea.vmem %s0, %s362
        $region64: #{dqn_forward.1} parent=59 // pred_fallthru
          _
      $region60: #{dqn_forward.1} parent=5 // pred_fallthru
        _
      %p364 = scmp.le.s32.totalorder 1, %s21
      %p365 = scmp.lt.s32.totalorder %s21, 3
      %p366 = pnand %p364, %p365
      %p367 = pneg %p366
      // Predicated region
      $region65: #{dqn_forward.1} parent=5 // pred_check
        _
      $region66: #{dqn_forward.1} parent=5 // pred_check_branch
        %369 = sbr.rel (%p366) target = $region68
      $region67: #{dqn_forward.1} parent=5 // pred_region
        %s370 = ssub.s32 %s21, 1
        %p371 = scmp.lt.s32.totalorder %s26, 1
        %s372 = scalar_select %p371, %s26, 1
        %s373 = smul.addr %s372, 80
        %s374 = smul.addr %s373, 4
        %s375 = scalar_lea.vmem %s0, %s374
        %p376 = pneg %p47
        %p377 = pneg %p44
        %p378 = pneg %p68
        %p379 = pneg %p65
        %p380 = pneg %p89
        %p381 = pneg %p86
        %p382 = pneg %p110
        %p383 = pneg %p107
        %p384 = pneg %p131
        %p385 = pneg %p128
        %p386 = pneg %p152
        %p387 = pneg %p149
        %p388 = pneg %p173
        %p389 = pneg %p170
        %p390 = pneg %p194
        %p391 = pneg %p191
        %p392 = pneg %p215
        %p393 = pneg %p212
        %p394 = pneg %p236
        %p395 = pneg %p233
        %p396 = pneg %p257
        %p397 = pneg %p254
        %p398 = pneg %p278
        %p399 = pneg %p275
        %p400 = pneg %p304
        %p401 = pneg %p301
        %s402 = sand.u32 %s291, 1
        %s403 = scalar_lea.sflag [#allocation3], %s402
        %s404 = sand.u32 %s291, 1
        %s405 = scalar_lea.vmem [#allocation2], %s404
        %p406 = scmp.lt.s32.totalorder %s26, 1
        %s407 = scalar_select %p406, %s26, 1
        %s408 = smul.addr %s407, 80
        %s409 = smul.addr %s408, 4
        %s410 = scalar_lea.vmem %s0, %s409
        %v412 = vld [vmem:[%s410] sm:$0xf]
        %v413 = vld [vmem:[%s410 + $0x4] sm:$0xf]
        %v414 = vld [vmem:[%s410 + $0x8] sm:$0xf]
        %v415 = vld [vmem:[%s410 + $0xc] sm:$0xf]
        %v416 = vld [vmem:[%s410 + $0x10] sm:$0xf]
        %v417 = vld [vmem:[%s410 + $0x14] sm:$0xf]
        %v418 = vld [vmem:[%s410 + $0x18] sm:$0xf]
        %v419 = vld [vmem:[%s410 + $0x1c] sm:$0xf]
        %v420 = vld [vmem:[%s410 + $0x20] sm:$0xf]
        %v421 = vld [vmem:[%s410 + $0x24] sm:$0xf]
        %v422 = vld [vmem:[%s410 + $0x28] sm:$0xf]
        %v423 = vld [vmem:[%s410 + $0x2c] sm:$0xf]
        %v424 = vld [vmem:[%s410 + $0x30] sm:$0xf]
        %v425 = vld [vmem:[%s410 + $0x34] sm:$0xf]
        %v426 = vld [vmem:[%s410 + $0x38] sm:$0xf]
        %v427 = vld [vmem:[%s410 + $0x3c] sm:$0xf]
        %v428 = vld [vmem:[%s410 + $0x40] sm:$0xf]
        %v429 = vld [vmem:[%s410 + $0x44] sm:$0xf]
        %v430 = vld [vmem:[%s410 + $0x48] sm:$0xf]
        %v431 = vld [vmem:[%s410 + $0x4c] sm:$0xf]
        %v432 = vld [vmem:[%s410 + $0x50] sm:$0xf]
        %v433 = vld [vmem:[%s410 + $0x54] sm:$0xf]
        %v434 = vld [vmem:[%s410 + $0x58] sm:$0xf]
        %v435 = vld [vmem:[%s410 + $0x5c] sm:$0xf]
        %v436 = vld [vmem:[%s410 + $0x60] sm:$0xf]
        %v437 = vld [vmem:[%s410 + $0x64] sm:$0xf]
        %v438 = vld [vmem:[%s410 + $0x68] sm:$0xf]
        %v439 = vld [vmem:[%s410 + $0x6c] sm:$0xf]
        %v440 = vld [vmem:[%s410 + $0x70] sm:$0xf]
        %v441 = vld [vmem:[%s410 + $0x74] sm:$0xf]
        %v442 = vld [vmem:[%s410 + $0x78] sm:$0xf]
        %v443 = vld [vmem:[%s410 + $0x7c] sm:$0xf]
        %v444 = vld [vmem:[%s410 + $0x80] sm:$0xf]
        %v445 = vld [vmem:[%s410 + $0x84] sm:$0xf]
        %v446 = vld [vmem:[%s410 + $0x88] sm:$0xf]
        %v447 = vld [vmem:[%s410 + $0x8c] sm:$0xf]
        %v448 = vld [vmem:[%s410 + $0x90] sm:$0xf]
        %v449 = vld [vmem:[%s410 + $0x94] sm:$0xf]
        %v450 = vld [vmem:[%s410 + $0x98] sm:$0xf]
        %v451 = vld [vmem:[%s410 + $0x9c] sm:$0xf]
        %v452 = vld [vmem:[%s410 + $0xa0] sm:$0xf]
        %v453 = vld [vmem:[%s410 + $0xa4] sm:$0xf]
        %v454 = vld [vmem:[%s410 + $0xa8] sm:$0xf]
        %v455 = vld [vmem:[%s410 + $0xac] sm:$0xf]
        %v456 = vld [vmem:[%s410 + $0xb0] sm:$0xf]
        %v457 = vld [vmem:[%s410 + $0xb4] sm:$0xf]
        %v458 = vld [vmem:[%s410 + $0xb8] sm:$0xf]
        %v459 = vld [vmem:[%s410 + $0xbc] sm:$0xf]
        %v460 = vld [vmem:[%s410 + $0xc0] sm:$0xf]
        %v461 = vld [vmem:[%s410 + $0xc4] sm:$0xf]
        %v462 = vld [vmem:[%s410 + $0xc8] sm:$0xf]
        %v463 = vld [vmem:[%s410 + $0xcc] sm:$0xf]
        %v464 = vld [vmem:[%s410 + $0xd0] sm:$0xf]
        %v465 = vld [vmem:[%s410 + $0xd4] sm:$0xf]
        %v466 = vld [vmem:[%s410 + $0xd8] sm:$0xf]
        %v467 = vld [vmem:[%s410 + $0xdc] sm:$0xf]
        %v468 = vld [vmem:[%s410 + $0xe0] sm:$0xf]
        %v469 = vld [vmem:[%s410 + $0xe4] sm:$0xf]
        %v470 = vld [vmem:[%s410 + $0xe8] sm:$0xf]
        %v471 = vld [vmem:[%s410 + $0xec] sm:$0xf]
        %v472 = vld [vmem:[%s410 + $0xf0] sm:$0xf]
        %v473 = vld [vmem:[%s410 + $0xf4] sm:$0xf]
        %v474 = vld [vmem:[%s410 + $0xf8] sm:$0xf]
        %v475 = vld [vmem:[%s410 + $0xfc] sm:$0xf]
        %v476 = vld [vmem:[%s410 + $0x100] sm:$0xf]
        %v477 = vld [vmem:[%s410 + $0x104] sm:$0xf]
        %v478 = vld [vmem:[%s410 + $0x108] sm:$0xf]
        %v479 = vld [vmem:[%s410 + $0x10c] sm:$0xf]
        %v480 = vld [vmem:[%s410 + $0x110] sm:$0xf]
        %v481 = vld [vmem:[%s410 + $0x114] sm:$0xf]
        %v482 = vld [vmem:[%s410 + $0x118] sm:$0xf]
        %v483 = vld [vmem:[%s410 + $0x11c] sm:$0xf]
        %v484 = vld [vmem:[%s410 + $0x120] sm:$0xf]
        %v485 = vld [vmem:[%s410 + $0x124] sm:$0xf]
        %v486 = vld [vmem:[%s410 + $0x128] sm:$0xf]
        %v487 = vld [vmem:[%s410 + $0x12c] sm:$0xf]
        %v488 = vld [vmem:[%s410 + $0x130] sm:$0xf]
        %v489 = vld [vmem:[%s410 + $0x134] sm:$0xf]
        %v490 = vld [vmem:[%s410 + $0x138] sm:$0xf]
        %v491 = vld [vmem:[%s410 + $0x13c] sm:$0xf]
        %v492 = vld [vmem:[%s2] sm:$0xf]
        %v493 = vld [vmem:[%s2 + $0x4] sm:$0xf]
        %v494 = vld [vmem:[%s2 + $0x8] sm:$0xf]
        %v495 = vld [vmem:[%s2 + $0xc] sm:$0xf]
        %v496 = vld [vmem:[%s2 + $0x10] sm:$0x3]
        %v577 = vunpack.c.l.b16 %v412
        %v578 = vunpack.c.l.b16 %v413
        %v579 = vunpack.c.l.b16 %v414
        %v580 = vunpack.c.l.b16 %v415
        %v581 = vunpack.c.l.b16 %v416
        %v582 = vunpack.c.l.b16 %v417
        %v583 = vunpack.c.l.b16 %v418
        %v584 = vunpack.c.l.b16 %v419
        %v585 = vunpack.c.l.b16 %v420
        %v586 = vunpack.c.l.b16 %v421
        %v587 = vunpack.c.l.b16 %v422
        %v588 = vunpack.c.l.b16 %v423
        %v589 = vunpack.c.l.b16 %v424
        %v590 = vunpack.c.l.b16 %v425
        %v591 = vunpack.c.l.b16 %v426
        %v592 = vunpack.c.l.b16 %v427
        %v593 = vunpack.c.l.b16 %v428
        %v594 = vunpack.c.l.b16 %v429
        %v595 = vunpack.c.l.b16 %v430
        %v596 = vunpack.c.l.b16 %v431
        %v597 = vunpack.c.l.b16 %v432
        %v598 = vunpack.c.l.b16 %v433
        %v599 = vunpack.c.l.b16 %v434
        %v600 = vunpack.c.l.b16 %v435
        %v601 = vunpack.c.l.b16 %v436
        %v602 = vunpack.c.l.b16 %v437
        %v603 = vunpack.c.l.b16 %v438
        %v604 = vunpack.c.l.b16 %v439
        %v605 = vunpack.c.l.b16 %v440
        %v606 = vunpack.c.l.b16 %v441
        %v607 = vunpack.c.l.b16 %v442
        %v608 = vunpack.c.l.b16 %v443
        %v609 = vunpack.c.l.b16 %v444
        %v610 = vunpack.c.l.b16 %v445
        %v611 = vunpack.c.l.b16 %v446
        %v612 = vunpack.c.l.b16 %v447
        %v613 = vunpack.c.l.b16 %v448
        %v614 = vunpack.c.l.b16 %v449
        %v615 = vunpack.c.l.b16 %v450
        %v616 = vunpack.c.l.b16 %v451
        %v617 = vunpack.c.l.b16 %v452
        %v618 = vunpack.c.l.b16 %v453
        %v619 = vunpack.c.l.b16 %v454
        %v620 = vunpack.c.l.b16 %v455
        %v621 = vunpack.c.l.b16 %v456
        %v622 = vunpack.c.l.b16 %v457
        %v623 = vunpack.c.l.b16 %v458
        %v624 = vunpack.c.l.b16 %v459
        %v625 = vunpack.c.l.b16 %v460
        %v626 = vunpack.c.l.b16 %v461
        %v627 = vunpack.c.l.b16 %v462
        %v628 = vunpack.c.l.b16 %v463
        %v629 = vunpack.c.l.b16 %v464
        %v630 = vunpack.c.l.b16 %v465
        %v631 = vunpack.c.l.b16 %v466
        %v632 = vunpack.c.l.b16 %v467
        %v633 = vunpack.c.l.b16 %v468
        %v634 = vunpack.c.l.b16 %v469
        %v635 = vunpack.c.l.b16 %v470
        %v636 = vunpack.c.l.b16 %v471
        %v637 = vunpack.c.l.b16 %v472
        %v638 = vunpack.c.l.b16 %v473
        %v639 = vunpack.c.l.b16 %v474
        %v640 = vunpack.c.l.b16 %v475
        %v641 = vunpack.c.l.b16 %v476
        %v642 = vunpack.c.l.b16 %v477
        %v643 = vunpack.c.l.b16 %v478
        %v644 = vunpack.c.l.b16 %v479
        %v645 = vunpack.c.l.b16 %v480
        %v646 = vunpack.c.l.b16 %v481
        %v647 = vunpack.c.l.b16 %v482
        %v648 = vunpack.c.l.b16 %v483
        %v649 = vunpack.c.l.b16 %v484
        %v650 = vunpack.c.l.b16 %v485
        %v651 = vunpack.c.l.b16 %v486
        %v652 = vunpack.c.l.b16 %v487
        %v653 = vunpack.c.l.b16 %v488
        %v654 = vunpack.c.l.b16 %v489
        %v655 = vunpack.c.l.b16 %v490
        %v656 = vunpack.c.l.b16 %v491
        %v657 = vpack.c.b16 %v578, %v577
        %v658 = vpack.c.b16 %v580, %v579
        %v659 = vpack.c.b16 %v582, %v581
        %v660 = vpack.c.b16 %v584, %v583
        %v661 = vpack.c.b16 %v586, %v585
        %v662 = vpack.c.b16 %v588, %v587
        %v663 = vpack.c.b16 %v590, %v589
        %v664 = vpack.c.b16 %v592, %v591
        %v665 = vpack.c.b16 %v594, %v593
        %v666 = vpack.c.b16 %v596, %v595
        %v667 = vpack.c.b16 %v598, %v597
        %v668 = vpack.c.b16 %v600, %v599
        %v669 = vpack.c.b16 %v602, %v601
        %v670 = vpack.c.b16 %v604, %v603
        %v671 = vpack.c.b16 %v606, %v605
        %v672 = vpack.c.b16 %v608, %v607
        %v673 = vpack.c.b16 %v610, %v609
        %v674 = vpack.c.b16 %v612, %v611
        %v675 = vpack.c.b16 %v614, %v613
        %v676 = vpack.c.b16 %v616, %v615
        %v677 = vpack.c.b16 %v618, %v617
        %v678 = vpack.c.b16 %v620, %v619
        %v679 = vpack.c.b16 %v622, %v621
        %v680 = vpack.c.b16 %v624, %v623
        %v681 = vpack.c.b16 %v626, %v625
        %v682 = vpack.c.b16 %v628, %v627
        %v683 = vpack.c.b16 %v630, %v629
        %v684 = vpack.c.b16 %v632, %v631
        %v685 = vpack.c.b16 %v634, %v633
        %v686 = vpack.c.b16 %v636, %v635
        %v687 = vpack.c.b16 %v638, %v637
        %v688 = vpack.c.b16 %v640, %v639
        %v689 = vpack.c.b16 %v642, %v641
        %v690 = vpack.c.b16 %v644, %v643
        %v691 = vpack.c.b16 %v646, %v645
        %v692 = vpack.c.b16 %v648, %v647
        %v693 = vpack.c.b16 %v650, %v649
        %v694 = vpack.c.b16 %v652, %v651
        %v695 = vpack.c.b16 %v654, %v653
        %v696 = vpack.c.b16 %v656, %v655
        %v702 = vunpack.c.l.b16 %v492
        %v703 = vunpack.c.l.b16 %v493
        %v704 = vunpack.c.l.b16 %v494
        %v705 = vunpack.c.l.b16 %v495
        %v706 = vunpack.c.l.b16 %v496
        %v707 = vpack.c.b16 %v703, %v702
        %v708 = vpack.c.b16 %v705, %v704
        %v709 = vpack.c.b16 %v706, %v706
        %vm712 = vcmask 293888
        %v714 = vsel %vm712, %v657, 0
        %v717 = vsel %vm712, %v658, 0
        %v720 = vsel %vm712, %v659, 0
        %v723 = vsel %vm712, %v660, 0
        %v726 = vsel %vm712, %v661, 0
        %v729 = vsel %vm712, %v662, 0
        %v732 = vsel %vm712, %v663, 0
        %v735 = vsel %vm712, %v664, 0
        %v738 = vsel %vm712, %v665, 0
        %v741 = vsel %vm712, %v666, 0
        %v744 = vsel %vm712, %v667, 0
        %v747 = vsel %vm712, %v668, 0
        %v750 = vsel %vm712, %v669, 0
        %v753 = vsel %vm712, %v670, 0
        %v756 = vsel %vm712, %v671, 0
        %v759 = vsel %vm712, %v672, 0
        %v762 = vsel %vm712, %v673, 0
        %v765 = vsel %vm712, %v674, 0
        %v768 = vsel %vm712, %v675, 0
        %v771 = vsel %vm712, %v676, 0
        %v774 = vsel %vm712, %v677, 0
        %v777 = vsel %vm712, %v678, 0
        %v780 = vsel %vm712, %v679, 0
        %v783 = vsel %vm712, %v680, 0
        %v786 = vsel %vm712, %v681, 0
        %v789 = vsel %vm712, %v682, 0
        %v792 = vsel %vm712, %v683, 0
        %v795 = vsel %vm712, %v684, 0
        %v798 = vsel %vm712, %v685, 0
        %v801 = vsel %vm712, %v686, 0
        %v804 = vsel %vm712, %v687, 0
        %v807 = vsel %vm712, %v688, 0
        %v810 = vsel %vm712, %v689, 0
        %v813 = vsel %vm712, %v690, 0
        %v816 = vsel %vm712, %v691, 0
        %v819 = vsel %vm712, %v692, 0
        %v822 = vsel %vm712, %v693, 0
        %v825 = vsel %vm712, %v694, 0
        %v828 = vsel %vm712, %v695, 0
        %v831 = vsel %vm712, %v696, 0
        %vm833 = vcmask 1041408
        %v835 = vsel %vm833, %v709, 0
        %837 = vmatprep.subr.bf16.mxu0 0
        %838 = vmatpush1.bf16.msra.mxu0 %v707
        %839 = vmatprep.subr.bf16.mxu0 0
        %840 = vmatpush1.bf16.msra.mxu0 %v708
        %841 = vmatprep.subr.bf16.mxu0 0
        %842 = vmatpush1.bf16.msra.mxu0 %v835
        %843 = vmatprep.subr.bf16.mxu0 0
        %844 = vmatpush1.bf16.msra.mxu0 0
        %845 = vmatprep.subr.bf16.mxu0 0
        %846 = vmatpush1.bf16.msra.mxu0 0
        %847 = vmatprep.subr.bf16.mxu0 0
        %848 = vmatpush1.bf16.msra.mxu0 0
        %849 = vmatprep.subr.bf16.mxu0 0
        %850 = vmatpush1.bf16.msra.mxu0 0
        %851 = vmatprep.subr.bf16.mxu0 0
        %852 = vmatpush1.bf16.msra.mxu0 0
        %853 = vmatprep.subr.bf16.mxu0 0
        %854 = vmatpush1.bf16.msra.mxu0 0
        %855 = vmatprep.subr.bf16.mxu0 0
        %856 = vmatpush1.bf16.msra.mxu0 0
        %857 = vmatprep.subr.bf16.mxu0 0
        %858 = vmatpush1.bf16.msra.mxu0 0
        %859 = vmatprep.subr.bf16.mxu0 0
        %860 = vmatpush1.bf16.msra.mxu0 0
        %861 = vmatprep.subr.bf16.mxu0 0
        %862 = vmatpush1.bf16.msra.mxu0 0
        %863 = vmatprep.subr.bf16.mxu0 0
        %864 = vmatpush1.bf16.msra.mxu0 0
        %865 = vmatprep.subr.bf16.mxu0 0
        %866 = vmatpush1.bf16.msra.mxu0 0
        %867 = vmatprep.subr.bf16.mxu0 0
        %868 = vmatpush1.bf16.msra.mxu0 0
        %869 = vmatprep.mubr.bf16.mxu0 0
        %870 = vmatmul.mubr.bf16.gmra.mrb[0].mxu0 %v714
        %v871 = vpop.f32.mrb[0].mxu0
        %v872 = vadd.f32 0.0, %v871
        %v873 = vpop.f32.mrb[0].mxu0
        %v874 = vpop.f32.mrb[0].mxu0
        %v875 = vadd.f32 0.0, %v874
        %v876 = vpop.f32.mrb[0].mxu0
        %877 = vmatprep.mubr.bf16.mxu0 0
        %878 = vmatmul.mubr.bf16.gmra.mrb[0].mxu0 %v717
        %v879 = vpop.f32.mrb[0].mxu0
        %v880 = vadd.f32 0.0, %v879
        %v881 = vpop.f32.mrb[0].mxu0
        %v882 = vpop.f32.mrb[0].mxu0
        %v883 = vadd.f32 0.0, %v882
        %v884 = vpop.f32.mrb[0].mxu0
        %885 = vmatprep.mubr.bf16.mxu0 0
        %886 = vmatmul.mubr.bf16.gmra.mrb[0].mxu0 %v720
        %v887 = vpop.f32.mrb[0].mxu0
        %v888 = vadd.f32 0.0, %v887
        %v889 = vpop.f32.mrb[0].mxu0
        %v890 = vpop.f32.mrb[0].mxu0
        %v891 = vadd.f32 0.0, %v890
        %v892 = vpop.f32.mrb[0].mxu0
        %893 = vmatprep.mubr.bf16.mxu0 0
        %894 = vmatmul.mubr.bf16.gmra.mrb[0].mxu0 %v723
        %v895 = vpop.f32.mrb[0].mxu0
        %v896 = vadd.f32 0.0, %v895
        %v897 = vpop.f32.mrb[0].mxu0
        %v898 = vpop.f32.mrb[0].mxu0
        %v899 = vadd.f32 0.0, %v898
        %v900 = vpop.f32.mrb[0].mxu0
        %901 = vmatprep.mubr.bf16.mxu0 0
        %902 = vmatmul.mubr.bf16.gmra.mrb[0].mxu0 %v726
        %v903 = vpop.f32.mrb[0].mxu0
        %v904 = vadd.f32 0.0, %v903
        %v905 = vpop.f32.mrb[0].mxu0
        %v906 = vpop.f32.mrb[0].mxu0
        %v907 = vadd.f32 0.0, %v906
        %v908 = vpop.f32.mrb[0].mxu0
        %909 = vmatprep.mubr.bf16.mxu0 0
        %910 = vmatmul.mubr.bf16.gmra.mrb[0].mxu0 %v729
        %v911 = vpop.f32.mrb[0].mxu0
        %v912 = vadd.f32 0.0, %v911
        %v913 = vpop.f32.mrb[0].mxu0
        %v914 = vpop.f32.mrb[0].mxu0
        %v915 = vadd.f32 0.0, %v914
        %v916 = vpop.f32.mrb[0].mxu0
        %917 = vmatprep.mubr.bf16.mxu0 0
        %918 = vmatmul.mubr.bf16.gmra.mrb[0].mxu0 %v732
        %v919 = vpop.f32.mrb[0].mxu0
        %v920 = vadd.f32 0.0, %v919
        %v921 = vpop.f32.mrb[0].mxu0
        %v922 = vpop.f32.mrb[0].mxu0
        %v923 = vadd.f32 0.0, %v922
        %v924 = vpop.f32.mrb[0].mxu0
        %925 = vmatprep.mubr.bf16.mxu0 0
        %926 = vmatmul.mubr.bf16.gmra.mrb[0].mxu0 %v735
        %v927 = vpop.f32.mrb[0].mxu0
        %v928 = vadd.f32 0.0, %v927
        %v929 = vpop.f32.mrb[0].mxu0
        %v930 = vpop.f32.mrb[0].mxu0
        %v931 = vadd.f32 0.0, %v930
        %v932 = vpop.f32.mrb[0].mxu0
        %933 = vmatprep.mubr.bf16.mxu0 0
        %934 = vmatmul.mubr.bf16.gmra.mrb[0].mxu0 %v738
        %v935 = vpop.f32.mrb[0].mxu0
        %v936 = vadd.f32 0.0, %v935
        %v937 = vpop.f32.mrb[0].mxu0
        %v938 = vpop.f32.mrb[0].mxu0
        %v939 = vadd.f32 0.0, %v938
        %v940 = vpop.f32.mrb[0].mxu0
        %941 = vmatprep.mubr.bf16.mxu0 0
        %942 = vmatmul.mubr.bf16.gmra.mrb[0].mxu0 %v741
        %v943 = vpop.f32.mrb[0].mxu0
        %v944 = vadd.f32 0.0, %v943
        %v945 = vpop.f32.mrb[0].mxu0
        %v946 = vpop.f32.mrb[0].mxu0
        %v947 = vadd.f32 0.0, %v946
        %v948 = vpop.f32.mrb[0].mxu0
        %949 = vmatprep.mubr.bf16.mxu0 0
        %950 = vmatmul.mubr.bf16.gmra.mrb[0].mxu0 %v744
        %v951 = vpop.f32.mrb[0].mxu0
        %v952 = vadd.f32 0.0, %v951
        %v953 = vpop.f32.mrb[0].mxu0
        %v954 = vpop.f32.mrb[0].mxu0
        %v955 = vadd.f32 0.0, %v954
        %v956 = vpop.f32.mrb[0].mxu0
        %957 = vmatprep.mubr.bf16.mxu0 0
        %958 = vmatmul.mubr.bf16.gmra.mrb[0].mxu0 %v747
        %v959 = vpop.f32.mrb[0].mxu0
        %v960 = vadd.f32 0.0, %v959
        %v961 = vpop.f32.mrb[0].mxu0
        %v962 = vpop.f32.mrb[0].mxu0
        %v963 = vadd.f32 0.0, %v962
        %v964 = vpop.f32.mrb[0].mxu0
        %965 = vmatprep.mubr.bf16.mxu0 0
        %966 = vmatmul.mubr.bf16.gmra.mrb[0].mxu0 %v750
        %v967 = vpop.f32.mrb[0].mxu0
        %v968 = vadd.f32 0.0, %v967
        %v969 = vpop.f32.mrb[0].mxu0
        %v970 = vpop.f32.mrb[0].mxu0
        %v971 = vadd.f32 0.0, %v970
        %v972 = vpop.f32.mrb[0].mxu0
        %973 = vmatprep.mubr.bf16.mxu0 0
        %974 = vmatmul.mubr.bf16.gmra.mrb[0].mxu0 %v753
        %v975 = vpop.f32.mrb[0].mxu0
        %v976 = vadd.f32 0.0, %v975
        %v977 = vpop.f32.mrb[0].mxu0
        %v978 = vpop.f32.mrb[0].mxu0
        %v979 = vadd.f32 0.0, %v978
        %v980 = vpop.f32.mrb[0].mxu0
        %981 = vmatprep.mubr.bf16.mxu0 0
        %982 = vmatmul.mubr.bf16.gmra.mrb[0].mxu0 %v756
        %v983 = vpop.f32.mrb[0].mxu0
        %v984 = vadd.f32 0.0, %v983
        %v985 = vpop.f32.mrb[0].mxu0
        %v986 = vpop.f32.mrb[0].mxu0
        %v987 = vadd.f32 0.0, %v986
        %v988 = vpop.f32.mrb[0].mxu0
        %989 = vmatprep.mubr.bf16.mxu0 0
        %990 = vmatmul.mubr.bf16.gmra.mrb[0].mxu0 %v759
        %v991 = vpop.f32.mrb[0].mxu0
        %v992 = vadd.f32 0.0, %v991
        %v993 = vpop.f32.mrb[0].mxu0
        %v994 = vpop.f32.mrb[0].mxu0
        %v995 = vadd.f32 0.0, %v994
        %v996 = vpop.f32.mrb[0].mxu0
        %997 = vmatprep.mubr.bf16.mxu0 0
        %998 = vmatmul.mubr.bf16.gmra.mrb[0].mxu0 %v762
        %v999 = vpop.f32.mrb[0].mxu0
        %v1000 = vadd.f32 0.0, %v999
        %v1001 = vpop.f32.mrb[0].mxu0
        %v1002 = vpop.f32.mrb[0].mxu0
        %v1003 = vadd.f32 0.0, %v1002
        %v1004 = vpop.f32.mrb[0].mxu0
        %1005 = vmatprep.mubr.bf16.mxu0 0
        %1006 = vmatmul.mubr.bf16.gmra.mrb[0].mxu0 %v765
        %v1007 = vpop.f32.mrb[0].mxu0
        %v1008 = vadd.f32 0.0, %v1007
        %v1009 = vpop.f32.mrb[0].mxu0
        %v1010 = vpop.f32.mrb[0].mxu0
        %v1011 = vadd.f32 0.0, %v1010
        %v1012 = vpop.f32.mrb[0].mxu0
        %1013 = vmatprep.mubr.bf16.mxu0 0
        %1014 = vmatmul.mubr.bf16.gmra.mrb[0].mxu0 %v768
        %v1015 = vpop.f32.mrb[0].mxu0
        %v1016 = vadd.f32 0.0, %v1015
        %v1017 = vpop.f32.mrb[0].mxu0
        %v1018 = vpop.f32.mrb[0].mxu0
        %v1019 = vadd.f32 0.0, %v1018
        %v1020 = vpop.f32.mrb[0].mxu0
        %1021 = vmatprep.mubr.bf16.mxu0 0
        %1022 = vmatmul.mubr.bf16.gmra.mrb[0].mxu0 %v771
        %v1023 = vpop.f32.mrb[0].mxu0
        %v1024 = vadd.f32 0.0, %v1023
        %v1025 = vpop.f32.mrb[0].mxu0
        %v1026 = vpop.f32.mrb[0].mxu0
        %v1027 = vadd.f32 0.0, %v1026
        %v1028 = vpop.f32.mrb[0].mxu0
        %1029 = vmatprep.mubr.bf16.mxu0 0
        %1030 = vmatmul.mubr.bf16.gmra.mrb[0].mxu0 %v774
        %v1031 = vpop.f32.mrb[0].mxu0
        %v1032 = vadd.f32 0.0, %v1031
        %v1033 = vpop.f32.mrb[0].mxu0
        %v1034 = vpop.f32.mrb[0].mxu0
        %v1035 = vadd.f32 0.0, %v1034
        %v1036 = vpop.f32.mrb[0].mxu0
        %1037 = vmatprep.mubr.bf16.mxu0 0
        %1038 = vmatmul.mubr.bf16.gmra.mrb[0].mxu0 %v777
        %v1039 = vpop.f32.mrb[0].mxu0
        %v1040 = vadd.f32 0.0, %v1039
        %v1041 = vpop.f32.mrb[0].mxu0
        %v1042 = vpop.f32.mrb[0].mxu0
        %v1043 = vadd.f32 0.0, %v1042
        %v1044 = vpop.f32.mrb[0].mxu0
        %1045 = vmatprep.mubr.bf16.mxu0 0
        %1046 = vmatmul.mubr.bf16.gmra.mrb[0].mxu0 %v780
        %v1047 = vpop.f32.mrb[0].mxu0
        %v1048 = vadd.f32 0.0, %v1047
        %v1049 = vpop.f32.mrb[0].mxu0
        %v1050 = vpop.f32.mrb[0].mxu0
        %v1051 = vadd.f32 0.0, %v1050
        %v1052 = vpop.f32.mrb[0].mxu0
        %1053 = vmatprep.mubr.bf16.mxu0 0
        %1054 = vmatmul.mubr.bf16.gmra.mrb[0].mxu0 %v783
        %v1055 = vpop.f32.mrb[0].mxu0
        %v1056 = vadd.f32 0.0, %v1055
        %v1057 = vpop.f32.mrb[0].mxu0
        %v1058 = vpop.f32.mrb[0].mxu0
        %v1059 = vadd.f32 0.0, %v1058
        %v1060 = vpop.f32.mrb[0].mxu0
        %1061 = vmatprep.mubr.bf16.mxu0 0
        %1062 = vmatmul.mubr.bf16.gmra.mrb[0].mxu0 %v786
        %v1063 = vpop.f32.mrb[0].mxu0
        %v1064 = vadd.f32 0.0, %v1063
        %v1065 = vpop.f32.mrb[0].mxu0
        %v1066 = vpop.f32.mrb[0].mxu0
        %v1067 = vadd.f32 0.0, %v1066
        %v1068 = vpop.f32.mrb[0].mxu0
        %1069 = vmatprep.mubr.bf16.mxu0 0
        %1070 = vmatmul.mubr.bf16.gmra.mrb[0].mxu0 %v789
        %v1071 = vpop.f32.mrb[0].mxu0
        %v1072 = vadd.f32 0.0, %v1071
        %v1073 = vpop.f32.mrb[0].mxu0
        %v1074 = vpop.f32.mrb[0].mxu0
        %v1075 = vadd.f32 0.0, %v1074
        %v1076 = vpop.f32.mrb[0].mxu0
        %1077 = vmatprep.mubr.bf16.mxu0 0
        %1078 = vmatmul.mubr.bf16.gmra.mrb[0].mxu0 %v792
        %v1079 = vpop.f32.mrb[0].mxu0
        %v1080 = vadd.f32 0.0, %v1079
        %v1081 = vpop.f32.mrb[0].mxu0
        %v1082 = vpop.f32.mrb[0].mxu0
        %v1083 = vadd.f32 0.0, %v1082
        %v1084 = vpop.f32.mrb[0].mxu0
        %1085 = vmatprep.mubr.bf16.mxu0 0
        %1086 = vmatmul.mubr.bf16.gmra.mrb[0].mxu0 %v795
        %v1087 = vpop.f32.mrb[0].mxu0
        %v1088 = vadd.f32 0.0, %v1087
        %v1089 = vpop.f32.mrb[0].mxu0
        %v1090 = vpop.f32.mrb[0].mxu0
        %v1091 = vadd.f32 0.0, %v1090
        %v1092 = vpop.f32.mrb[0].mxu0
        %1093 = vmatprep.mubr.bf16.mxu0 0
        %1094 = vmatmul.mubr.bf16.gmra.mrb[0].mxu0 %v798
        %v1095 = vpop.f32.mrb[0].mxu0
        %v1096 = vadd.f32 0.0, %v1095
        %v1097 = vpop.f32.mrb[0].mxu0
        %v1098 = vpop.f32.mrb[0].mxu0
        %v1099 = vadd.f32 0.0, %v1098
        %v1100 = vpop.f32.mrb[0].mxu0
        %1101 = vmatprep.mubr.bf16.mxu0 0
        %1102 = vmatmul.mubr.bf16.gmra.mrb[0].mxu0 %v801
        %v1103 = vpop.f32.mrb[0].mxu0
        %v1104 = vadd.f32 0.0, %v1103
        %v1105 = vpop.f32.mrb[0].mxu0
        %v1106 = vpop.f32.mrb[0].mxu0
        %v1107 = vadd.f32 0.0, %v1106
        %v1108 = vpop.f32.mrb[0].mxu0
        %1109 = vmatprep.mubr.bf16.mxu0 0
        %1110 = vmatmul.mubr.bf16.gmra.mrb[0].mxu0 %v804
        %v1111 = vpop.f32.mrb[0].mxu0
        %v1112 = vadd.f32 0.0, %v1111
        %v1113 = vpop.f32.mrb[0].mxu0
        %v1114 = vpop.f32.mrb[0].mxu0
        %v1115 = vadd.f32 0.0, %v1114
        %v1116 = vpop.f32.mrb[0].mxu0
        %1117 = vmatprep.mubr.bf16.mxu0 0
        %1118 = vmatmul.mubr.bf16.gmra.mrb[0].mxu0 %v807
        %v1119 = vpop.f32.mrb[0].mxu0
        %v1120 = vadd.f32 0.0, %v1119
        %v1121 = vpop.f32.mrb[0].mxu0
        %v1122 = vpop.f32.mrb[0].mxu0
        %v1123 = vadd.f32 0.0, %v1122
        %v1124 = vpop.f32.mrb[0].mxu0
        %1125 = vmatprep.mubr.bf16.mxu0 0
        %1126 = vmatmul.mubr.bf16.gmra.mrb[0].mxu0 %v810
        %v1127 = vpop.f32.mrb[0].mxu0
        %v1128 = vadd.f32 0.0, %v1127
        %v1129 = vpop.f32.mrb[0].mxu0
        %v1130 = vpop.f32.mrb[0].mxu0
        %v1131 = vadd.f32 0.0, %v1130
        %v1132 = vpop.f32.mrb[0].mxu0
        %1133 = vmatprep.mubr.bf16.mxu0 0
        %1134 = vmatmul.mubr.bf16.gmra.mrb[0].mxu0 %v813
        %v1135 = vpop.f32.mrb[0].mxu0
        %v1136 = vadd.f32 0.0, %v1135
        %v1137 = vpop.f32.mrb[0].mxu0
        %v1138 = vpop.f32.mrb[0].mxu0
        %v1139 = vadd.f32 0.0, %v1138
        %v1140 = vpop.f32.mrb[0].mxu0
        %1141 = vmatprep.mubr.bf16.mxu0 0
        %1142 = vmatmul.mubr.bf16.gmra.mrb[0].mxu0 %v816
        %v1143 = vpop.f32.mrb[0].mxu0
        %v1144 = vadd.f32 0.0, %v1143
        %v1145 = vpop.f32.mrb[0].mxu0
        %v1146 = vpop.f32.mrb[0].mxu0
        %v1147 = vadd.f32 0.0, %v1146
        %v1148 = vpop.f32.mrb[0].mxu0
        %1149 = vmatprep.mubr.bf16.mxu0 0
        %1150 = vmatmul.mubr.bf16.gmra.mrb[0].mxu0 %v819
        %v1151 = vpop.f32.mrb[0].mxu0
        %v1152 = vadd.f32 0.0, %v1151
        %v1153 = vpop.f32.mrb[0].mxu0
        %v1154 = vpop.f32.mrb[0].mxu0
        %v1155 = vadd.f32 0.0, %v1154
        %v1156 = vpop.f32.mrb[0].mxu0
        %1157 = vmatprep.mubr.bf16.mxu0 0
        %1158 = vmatmul.mubr.bf16.gmra.mrb[0].mxu0 %v822
        %v1159 = vpop.f32.mrb[0].mxu0
        %v1160 = vadd.f32 0.0, %v1159
        %v1161 = vpop.f32.mrb[0].mxu0
        %v1162 = vpop.f32.mrb[0].mxu0
        %v1163 = vadd.f32 0.0, %v1162
        %v1164 = vpop.f32.mrb[0].mxu0
        %1165 = vmatprep.mubr.bf16.mxu0 0
        %1166 = vmatmul.mubr.bf16.gmra.mrb[0].mxu0 %v825
        %v1167 = vpop.f32.mrb[0].mxu0
        %v1168 = vadd.f32 0.0, %v1167
        %v1169 = vpop.f32.mrb[0].mxu0
        %v1170 = vpop.f32.mrb[0].mxu0
        %v1171 = vadd.f32 0.0, %v1170
        %v1172 = vpop.f32.mrb[0].mxu0
        %1173 = vmatprep.mubr.bf16.mxu0 0
        %1174 = vmatmul.mubr.bf16.gmra.mrb[0].mxu0 %v828
        %v1175 = vpop.f32.mrb[0].mxu0
        %v1176 = vadd.f32 0.0, %v1175
        %v1177 = vpop.f32.mrb[0].mxu0
        %v1178 = vpop.f32.mrb[0].mxu0
        %v1179 = vadd.f32 0.0, %v1178
        %v1180 = vpop.f32.mrb[0].mxu0
        %1181 = vmatprep.mubr.bf16.mxu0 0
        %1182 = vmatmul.mubr.bf16.gmra.mrb[0].mxu0 %v831
        %v1183 = vpop.f32.mrb[0].mxu0
        %v1184 = vadd.f32 0.0, %v1183
        %v1185 = vpop.f32.mrb[0].mxu0
        %v1186 = vpop.f32.mrb[0].mxu0
        %v1187 = vadd.f32 0.0, %v1186
        %v1188 = vpop.f32.mrb[0].mxu0
        %1189 = vdwg.mxu0
        %vm1190 = vcmask 523264
        %v1191 = vsel %vm1190, %v872, -inf
        %v1192 = vsel %vm1190, %v891, -inf
        %v1193 = vmax.f32 %v1191, %v1192
        %v1194 = vsel %vm1190, %v912, -inf
        %v1195 = vmax.f32 %v1193, %v1194
        %v1196 = vsel %vm1190, %v931, -inf
        %v1197 = vmax.f32 %v1195, %v1196
        %v1198 = vsel %vm1190, %v952, -inf
        %v1199 = vmax.f32 %v1197, %v1198
        %v1200 = vsel %vm1190, %v971, -inf
        %v1201 = vmax.f32 %v1199, %v1200
        %v1202 = vsel %vm1190, %v992, -inf
        %v1203 = vmax.f32 %v1201, %v1202
        %v1204 = vsel %vm1190, %v1011, -inf
        %v1205 = vmax.f32 %v1203, %v1204
        %v1206 = vsel %vm1190, %v1032, -inf
        %v1207 = vmax.f32 %v1205, %v1206
        %v1208 = vsel %vm1190, %v1051, -inf
        %v1209 = vmax.f32 %v1207, %v1208
        %v1210 = vsel %vm1190, %v1072, -inf
        %v1211 = vmax.f32 %v1209, %v1210
        %v1212 = vsel %vm1190, %v1091, -inf
        %v1213 = vmax.f32 %v1211, %v1212
        %v1214 = vsel %vm1190, %v1112, -inf
        %v1215 = vmax.f32 %v1213, %v1214
        %v1216 = vsel %vm1190, %v1131, -inf
        %v1217 = vmax.f32 %v1215, %v1216
        %v1218 = vsel %vm1190, %v1152, -inf
        %v1219 = vmax.f32 %v1217, %v1218
        %v1220 = vsel %vm1190, %v1171, -inf
        %v1221 = vmax.f32 %v1219, %v1220
        %v1222 = vsel %vm1190, %v875, -inf
        %v1223 = vsel %vm1190, %v896, -inf
        %v1224 = vmax.f32 %v1222, %v1223
        %v1225 = vsel %vm1190, %v915, -inf
        %v1226 = vmax.f32 %v1224, %v1225
        %v1227 = vsel %vm1190, %v936, -inf
        %v1228 = vmax.f32 %v1226, %v1227
        %v1229 = vsel %vm1190, %v955, -inf
        %v1230 = vmax.f32 %v1228, %v1229
        %v1231 = vsel %vm1190, %v976, -inf
        %v1232 = vmax.f32 %v1230, %v1231
        %v1233 = vsel %vm1190, %v995, -inf
        %v1234 = vmax.f32 %v1232, %v1233
        %v1235 = vsel %vm1190, %v1016, -inf
        %v1236 = vmax.f32 %v1234, %v1235
        %v1237 = vsel %vm1190, %v1035, -inf
        %v1238 = vmax.f32 %v1236, %v1237
        %v1239 = vsel %vm1190, %v1056, -inf
        %v1240 = vmax.f32 %v1238, %v1239
        %v1241 = vsel %vm1190, %v1075, -inf
        %v1242 = vmax.f32 %v1240, %v1241
        %v1243 = vsel %vm1190, %v1096, -inf
        %v1244 = vmax.f32 %v1242, %v1243
        %v1245 = vsel %vm1190, %v1115, -inf
        %v1246 = vmax.f32 %v1244, %v1245
        %v1247 = vsel %vm1190, %v1136, -inf
        %v1248 = vmax.f32 %v1246, %v1247
        %v1249 = vsel %vm1190, %v1155, -inf
        %v1250 = vmax.f32 %v1248, %v1249
        %v1251 = vsel %vm1190, %v1176, -inf
        %v1252 = vmax.f32 %v1250, %v1251
        %v1253 = vsel %vm1190, %v880, -inf
        %v1254 = vsel %vm1190, %v899, -inf
        %v1255 = vmax.f32 %v1253, %v1254
        %v1256 = vsel %vm1190, %v920, -inf
        %v1257 = vmax.f32 %v1255, %v1256
        %v1258 = vsel %vm1190, %v939, -inf
        %v1259 = vmax.f32 %v1257, %v1258
        %v1260 = vsel %vm1190, %v960, -inf
        %v1261 = vmax.f32 %v1259, %v1260
        %v1262 = vsel %vm1190, %v979, -inf
        %v1263 = vmax.f32 %v1261, %v1262
        %v1264 = vsel %vm1190, %v1000, -inf
        %v1265 = vmax.f32 %v1263, %v1264
        %v1266 = vsel %vm1190, %v1019, -inf
        %v1267 = vmax.f32 %v1265, %v1266
        %v1268 = vsel %vm1190, %v1040, -inf
        %v1269 = vmax.f32 %v1267, %v1268
        %v1270 = vsel %vm1190, %v1059, -inf
        %v1271 = vmax.f32 %v1269, %v1270
        %v1272 = vsel %vm1190, %v1080, -inf
        %v1273 = vmax.f32 %v1271, %v1272
        %v1274 = vsel %vm1190, %v1099, -inf
        %v1275 = vmax.f32 %v1273, %v1274
        %v1276 = vsel %vm1190, %v1120, -inf
        %v1277 = vmax.f32 %v1275, %v1276
        %v1278 = vsel %vm1190, %v1139, -inf
        %v1279 = vmax.f32 %v1277, %v1278
        %v1280 = vsel %vm1190, %v1160, -inf
        %v1281 = vmax.f32 %v1279, %v1280
        %v1282 = vsel %vm1190, %v1179, -inf
        %v1283 = vmax.f32 %v1281, %v1282
        %v1284 = vsel %vm1190, %v883, -inf
        %v1285 = vsel %vm1190, %v904, -inf
        %v1286 = vmax.f32 %v1284, %v1285
        %v1287 = vsel %vm1190, %v923, -inf
        %v1288 = vmax.f32 %v1286, %v1287
        %v1289 = vsel %vm1190, %v944, -inf
        %v1290 = vmax.f32 %v1288, %v1289
        %v1291 = vsel %vm1190, %v963, -inf
        %v1292 = vmax.f32 %v1290, %v1291
        %v1293 = vsel %vm1190, %v984, -inf
        %v1294 = vmax.f32 %v1292, %v1293
        %v1295 = vsel %vm1190, %v1003, -inf
        %v1296 = vmax.f32 %v1294, %v1295
        %v1297 = vsel %vm1190, %v1024, -inf
        %v1298 = vmax.f32 %v1296, %v1297
        %v1299 = vsel %vm1190, %v1043, -inf
        %v1300 = vmax.f32 %v1298, %v1299
        %v1301 = vsel %vm1190, %v1064, -inf
        %v1302 = vmax.f32 %v1300, %v1301
        %v1303 = vsel %vm1190, %v1083, -inf
        %v1304 = vmax.f32 %v1302, %v1303
        %v1305 = vsel %vm1190, %v1104, -inf
        %v1306 = vmax.f32 %v1304, %v1305
        %v1307 = vsel %vm1190, %v1123, -inf
        %v1308 = vmax.f32 %v1306, %v1307
        %v1309 = vsel %vm1190, %v1144, -inf
        %v1310 = vmax.f32 %v1308, %v1309
        %v1311 = vsel %vm1190, %v1163, -inf
        %v1312 = vmax.f32 %v1310, %v1311
        %v1313 = vsel %vm1190, %v1184, -inf
        %v1314 = vmax.f32 %v1312, %v1313
        %v1315 = vsel %vm1190, %v888, -inf
        %v1316 = vsel %vm1190, %v907, -inf
        %v1317 = vmax.f32 %v1315, %v1316
        %v1318 = vsel %vm1190, %v928, -inf
        %v1319 = vmax.f32 %v1317, %v1318
        %v1320 = vsel %vm1190, %v947, -inf
        %v1321 = vmax.f32 %v1319, %v1320
        %v1322 = vsel %vm1190, %v968, -inf
        %v1323 = vmax.f32 %v1321, %v1322
        %v1324 = vsel %vm1190, %v987, -inf
        %v1325 = vmax.f32 %v1323, %v1324
        %v1326 = vsel %vm1190, %v1008, -inf
        %v1327 = vmax.f32 %v1325, %v1326
        %v1328 = vsel %vm1190, %v1027, -inf
        %v1329 = vmax.f32 %v1327, %v1328
        %v1330 = vsel %vm1190, %v1048, -inf
        %v1331 = vmax.f32 %v1329, %v1330
        %v1332 = vsel %vm1190, %v1067, -inf
        %v1333 = vmax.f32 %v1331, %v1332
        %v1334 = vsel %vm1190, %v1088, -inf
        %v1335 = vmax.f32 %v1333, %v1334
        %v1336 = vsel %vm1190, %v1107, -inf
        %v1337 = vmax.f32 %v1335, %v1336
        %v1338 = vsel %vm1190, %v1128, -inf
        %v1339 = vmax.f32 %v1337, %v1338
        %v1340 = vsel %vm1190, %v1147, -inf
        %v1341 = vmax.f32 %v1339, %v1340
        %v1342 = vsel %vm1190, %v1168, -inf
        %v1343 = vmax.f32 %v1341, %v1342
        %v1344 = vsel %vm1190, %v1187, -inf
        %v1345 = vmax.f32 %v1343, %v1344
        %v1346 = vld [vmem:[%s3] sm:$0x1]
        %v1348 = vlaneseq
        %v1349 = vshrl.u32 %v1348, 7
        %v1350 = vsub.s32 0, %v1349
        %v1351 = vrot.slane %v1346, %v1350
        %v1353 = vadd.f32 %v1221, %v1351
        %v1354 = vadd.f32 %v1252, %v1351
        %v1355 = vadd.f32 %v1283, %v1351
        %v1356 = vadd.f32 %v1314, %v1351
        %v1357 = vadd.f32 %v1345, %v1351
        %v1358 = vmax.f32 %v1353, 0.0
        %v1359 = vmax.f32 %v1354, 0.0
        %v1360 = vmax.f32 %v1355, 0.0
        %v1361 = vmax.f32 %v1356, 0.0
        %v1362 = vmax.f32 %v1357, 0.0
        %v1363 = vpack.c.bf16 %v1359, %v1358
        %v1364 = vpack.c.bf16 %v1360, %v1360
        %v1365 = vld [vmem:[%s4] sm:$0xf]
        %v1366 = vld [vmem:[%s4 + $0x4] sm:$0xf]
        %v1367 = vld [vmem:[%s4 + $0x8] sm:$0xf]
        %v1368 = vld [vmem:[%s4 + $0xc] sm:$0xf]
        %v1369 = vld [vmem:[%s4 + $0x10] sm:$0xf]
        %v1370 = vld [vmem:[%s4 + $0x14] sm:$0xf]
        %v1371 = vld [vmem:[%s4 + $0x18] sm:$0xf]
        %v1372 = vld [vmem:[%s4 + $0x1c] sm:$0xf]
        %v1373 = vpack.c.bf16 %v1361, %v1360
        %s1374 = scalar_lea.vmem %s4, 32
        %v1375 = vld [vmem:[%s1374] sm:$0xf]
        %v1376 = vld [vmem:[%s1374 + $0x4] sm:$0xf]
        %v1377 = vld [vmem:[%s1374 + $0x8] sm:$0xf]
        %v1378 = vld [vmem:[%s1374 + $0xc] sm:$0xf]
        %v1379 = vld [vmem:[%s1374 + $0x10] sm:$0xf]
        %v1380 = vld [vmem:[%s1374 + $0x14] sm:$0xf]
        %v1381 = vld [vmem:[%s1374 + $0x18] sm:$0xf]
        %v1382 = vld [vmem:[%s1374 + $0x1c] sm:$0xf]
        %vm1383 = vsmask.f32 7424
        %v1385 = vshrl.u32 %v1363, 16
        %v1387 = vshll.u32 %v1363, 16
        %v1389 = vrot.slane %v1387, 1
        %v1390 = vor.u32 %v1385, %v1389
        %v1392 = vshll.u32 %v1373, 16
        %v1394 = vrot.slane %v1392, 1
        %v1395 = vsel %vm1383, %v1390, %v1394
        %v1396 = vshrl.u32 %v1373, 16
        %v1398 = vor.u32 %v1396, %v1394
        %v1407 = vunpack.c.l.b16 %v1375
        %v1408 = vunpack.c.l.b16 %v1376
        %v1409 = vunpack.c.l.b16 %v1377
        %v1410 = vunpack.c.l.b16 %v1378
        %v1411 = vunpack.c.l.b16 %v1379
        %v1412 = vunpack.c.l.b16 %v1380
        %v1413 = vunpack.c.l.b16 %v1381
        %v1414 = vunpack.c.l.b16 %v1382
        %v1415 = vpack.c.b16 %v1408, %v1407
        %v1416 = vpack.c.b16 %v1410, %v1409
        %v1417 = vpack.c.b16 %v1412, %v1411
        %v1418 = vpack.c.b16 %v1414, %v1413
        %v1424 = vsel %vm1190, %v1395, 0
        %v1427 = vsel %vm1190, %v1398, 0
        %1429 = vmatprep.subr.bf16.mxu0 0
        %1430 = vmatpush1.bf16.msra.mxu0 %v1415
        %1431 = vmatprep.subr.bf16.mxu0 0
        %1432 = vmatpush1.bf16.msra.mxu0 %v1416
        %1433 = vmatprep.subr.bf16.mxu0 0
        %1434 = vmatpush1.bf16.msra.mxu0 %v1417
        %1435 = vmatprep.subr.bf16.mxu0 0
        %1436 = vmatpush1.bf16.msra.mxu0 %v1418
        %1437 = vmatprep.subr.bf16.mxu0 0
        %1438 = vmatpush1.bf16.msra.mxu0 0
        %1439 = vmatprep.subr.bf16.mxu0 0
        %1440 = vmatpush1.bf16.msra.mxu0 0
        %1441 = vmatprep.subr.bf16.mxu0 0
        %1442 = vmatpush1.bf16.msra.mxu0 0
        %1443 = vmatprep.subr.bf16.mxu0 0
        %1444 = vmatpush1.bf16.msra.mxu0 0
        %1445 = vmatprep.subr.bf16.mxu0 0
        %1446 = vmatpush1.bf16.msra.mxu0 0
        %1447 = vmatprep.subr.bf16.mxu0 0
        %1448 = vmatpush1.bf16.msra.mxu0 0
        %1449 = vmatprep.subr.bf16.mxu0 0
        %1450 = vmatpush1.bf16.msra.mxu0 0
        %1451 = vmatprep.subr.bf16.mxu0 0
        %1452 = vmatpush1.bf16.msra.mxu0 0
        %1453 = vmatprep.subr.bf16.mxu0 0
        %1454 = vmatpush1.bf16.msra.mxu0 0
        %1455 = vmatprep.subr.bf16.mxu0 0
        %1456 = vmatpush1.bf16.msra.mxu0 0
        %1457 = vmatprep.subr.bf16.mxu0 0
        %1458 = vmatpush1.bf16.msra.mxu0 0
        %1459 = vmatprep.subr.bf16.mxu0 0
        %1460 = vmatpush1.bf16.msra.mxu0 0
        %1461 = vmatprep.mubr.bf16.mxu0 0
        %1462 = vmatmul.mubr.bf16.gmra.mrb[0].mxu0 %v1424
        %v1463 = vpop.f32.mrb[0].mxu0
        %v1464 = vadd.f32 0.0, %v1463
        %v1465 = vpop.f32.mrb[0].mxu0
        %v1466 = vpop.f32.mrb[0].mxu0
        %v1467 = vadd.f32 0.0, %v1466
        %v1468 = vpop.f32.mrb[0].mxu0
        %1469 = vmatprep.mubr.bf16.mxu0 0
        %1470 = vmatmul.mubr.bf16.gmra.mrb[0].mxu0 %v1427
        %v1471 = vpop.f32.mrb[0].mxu0
        %v1472 = vadd.f32 0.0, %v1471
        %v1473 = vpop.f32.mrb[0].mxu0
        %v1474 = vpop.f32.mrb[0].mxu0
        %v1475 = vpop.f32.mrb[0].mxu0
        %1476 = vdwg.mxu0
        %v1485 = vunpack.c.l.b16 %v1365
        %v1486 = vunpack.c.l.b16 %v1366
        %v1487 = vunpack.c.l.b16 %v1367
        %v1488 = vunpack.c.l.b16 %v1368
        %v1489 = vunpack.c.l.b16 %v1369
        %v1490 = vunpack.c.l.b16 %v1370
        %v1491 = vunpack.c.l.b16 %v1371
        %v1492 = vunpack.c.l.b16 %v1372
        %v1493 = vpack.c.b16 %v1486, %v1485
        %v1494 = vpack.c.b16 %v1488, %v1487
        %v1495 = vpack.c.b16 %v1490, %v1489
        %v1496 = vpack.c.b16 %v1492, %v1491
        %v1501 = vsel %vm1190, %v1363, 0
        %v1504 = vsel %vm1190, %v1364, 0
        %1506 = vmatprep.subr.bf16.mxu0 0
        %1507 = vmatpush1.bf16.msra.mxu0 %v1493
        %1508 = vmatprep.subr.bf16.mxu0 0
        %1509 = vmatpush1.bf16.msra.mxu0 %v1494
        %1510 = vmatprep.subr.bf16.mxu0 0
        %1511 = vmatpush1.bf16.msra.mxu0 %v1495
        %1512 = vmatprep.subr.bf16.mxu0 0
        %1513 = vmatpush1.bf16.msra.mxu0 %v1496
        %1514 = vmatprep.subr.bf16.mxu0 0
        %1515 = vmatpush1.bf16.msra.mxu0 0
        %1516 = vmatprep.subr.bf16.mxu0 0
        %1517 = vmatpush1.bf16.msra.mxu0 0
        %1518 = vmatprep.subr.bf16.mxu0 0
        %1519 = vmatpush1.bf16.msra.mxu0 0
        %1520 = vmatprep.subr.bf16.mxu0 0
        %1521 = vmatpush1.bf16.msra.mxu0 0
        %1522 = vmatprep.subr.bf16.mxu0 0
        %1523 = vmatpush1.bf16.msra.mxu0 0
        %1524 = vmatprep.subr.bf16.mxu0 0
        %1525 = vmatpush1.bf16.msra.mxu0 0
        %1526 = vmatprep.subr.bf16.mxu0 0
        %1527 = vmatpush1.bf16.msra.mxu0 0
        %1528 = vmatprep.subr.bf16.mxu0 0
        %1529 = vmatpush1.bf16.msra.mxu0 0
        %1530 = vmatprep.subr.bf16.mxu0 0
        %1531 = vmatpush1.bf16.msra.mxu0 0
        %1532 = vmatprep.subr.bf16.mxu0 0
        %1533 = vmatpush1.bf16.msra.mxu0 0
        %1534 = vmatprep.subr.bf16.mxu0 0
        %1535 = vmatpush1.bf16.msra.mxu0 0
        %1536 = vmatprep.subr.bf16.mxu0 0
        %1537 = vmatpush1.bf16.msra.mxu0 0
        %1538 = vmatprep.mubr.bf16.mxu0 0
        %1539 = vmatmul.mubr.bf16.gmra.mrb[0].mxu0 %v1501
        %v1540 = vpop.f32.mrb[0].mxu0
        %v1541 = vadd.f32 %v1464, %v1540
        %v1542 = vpop.f32.mrb[0].mxu0
        %v1543 = vpop.f32.mrb[0].mxu0
        %v1544 = vadd.f32 %v1467, %v1543
        %v1545 = vpop.f32.mrb[0].mxu0
        %1546 = vmatprep.mubr.bf16.mxu0 0
        %1547 = vmatmul.mubr.bf16.gmra.mrb[0].mxu0 %v1504
        %v1548 = vpop.f32.mrb[0].mxu0
        %v1549 = vadd.f32 %v1472, %v1548
        %v1550 = vpop.f32.mrb[0].mxu0
        %v1551 = vpop.f32.mrb[0].mxu0
        %v1552 = vpop.f32.mrb[0].mxu0
        %1553 = vdwg.mxu0
        %s1554 = scalar_lea.vmem %s4, 64
        %v1555 = vld [vmem:[%s1554] sm:$0xf]
        %v1556 = vld [vmem:[%s1554 + $0x4] sm:$0xf]
        %v1557 = vld [vmem:[%s1554 + $0x8] sm:$0xf]
        %v1558 = vld [vmem:[%s1554 + $0xc] sm:$0xf]
        %v1559 = vld [vmem:[%s1554 + $0x10] sm:$0xf]
        %v1560 = vld [vmem:[%s1554 + $0x14] sm:$0xf]
        %v1561 = vld [vmem:[%s1554 + $0x18] sm:$0xf]
        %v1562 = vld [vmem:[%s1554 + $0x1c] sm:$0xf]
        %vm1565 = vcmask 1046528
        %v1566 = vrot.slane %v1363, 1
        %v1567 = vrot.slane %v1373, 1
        %v1568 = vsel %vm1565, %v1566, %v1567
        %v1577 = vunpack.c.l.b16 %v1555
        %v1578 = vunpack.c.l.b16 %v1556
        %v1579 = vunpack.c.l.b16 %v1557
        %v1580 = vunpack.c.l.b16 %v1558
        %v1581 = vunpack.c.l.b16 %v1559
        %v1582 = vunpack.c.l.b16 %v1560
        %v1583 = vunpack.c.l.b16 %v1561
        %v1584 = vunpack.c.l.b16 %v1562
        %v1585 = vpack.c.b16 %v1578, %v1577
        %v1586 = vpack.c.b16 %v1580, %v1579
        %v1587 = vpack.c.b16 %v1582, %v1581
        %v1588 = vpack.c.b16 %v1584, %v1583
        %v1594 = vsel %vm1190, %v1568, 0
        %v1597 = vsel %vm1190, %v1567, 0
        %1599 = vmatprep.subr.bf16.mxu0 0
        %1600 = vmatpush1.bf16.msra.mxu0 %v1585
        %1601 = vmatprep.subr.bf16.mxu0 0
        %1602 = vmatpush1.bf16.msra.mxu0 %v1586
        %1603 = vmatprep.subr.bf16.mxu0 0
        %1604 = vmatpush1.bf16.msra.mxu0 %v1587
        %1605 = vmatprep.subr.bf16.mxu0 0
        %1606 = vmatpush1.bf16.msra.mxu0 %v1588
        %1607 = vmatprep.subr.bf16.mxu0 0
        %1608 = vmatpush1.bf16.msra.mxu0 0
        %1609 = vmatprep.subr.bf16.mxu0 0
        %1610 = vmatpush1.bf16.msra.mxu0 0
        %1611 = vmatprep.subr.bf16.mxu0 0
        %1612 = vmatpush1.bf16.msra.mxu0 0
        %1613 = vmatprep.subr.bf16.mxu0 0
        %1614 = vmatpush1.bf16.msra.mxu0 0
        %1615 = vmatprep.subr.bf16.mxu0 0
        %1616 = vmatpush1.bf16.msra.mxu0 0
        %1617 = vmatprep.subr.bf16.mxu0 0
        %1618 = vmatpush1.bf16.msra.mxu0 0
        %1619 = vmatprep.subr.bf16.mxu0 0
        %1620 = vmatpush1.bf16.msra.mxu0 0
        %1621 = vmatprep.subr.bf16.mxu0 0
        %1622 = vmatpush1.bf16.msra.mxu0 0
        %1623 = vmatprep.subr.bf16.mxu0 0
        %1624 = vmatpush1.bf16.msra.mxu0 0
        %1625 = vmatprep.subr.bf16.mxu0 0
        %1626 = vmatpush1.bf16.msra.mxu0 0
        %1627 = vmatprep.subr.bf16.mxu0 0
        %1628 = vmatpush1.bf16.msra.mxu0 0
        %1629 = vmatprep.subr.bf16.mxu0 0
        %1630 = vmatpush1.bf16.msra.mxu0 0
        %1631 = vmatprep.mubr.bf16.mxu0 0
        %1632 = vmatmul.mubr.bf16.gmra.mrb[0].mxu0 %v1594
        %v1633 = vpop.f32.mrb[0].mxu0
        %v1634 = vadd.f32 0.0, %v1633
        %v1635 = vpop.f32.mrb[0].mxu0
        %v1636 = vpop.f32.mrb[0].mxu0
        %v1637 = vadd.f32 0.0, %v1636
        %v1638 = vpop.f32.mrb[0].mxu0
        %1639 = vmatprep.mubr.bf16.mxu0 0
        %1640 = vmatmul.mubr.bf16.gmra.mrb[0].mxu0 %v1597
        %v1641 = vpop.f32.mrb[0].mxu0
        %v1642 = vadd.f32 0.0, %v1641
        %v1643 = vpop.f32.mrb[0].mxu0
        %v1644 = vpop.f32.mrb[0].mxu0
        %v1645 = vpop.f32.mrb[0].mxu0
        %1646 = vdwg.mxu0
        %v1647 = vadd.f32 %v1541, %v1634
        %v1648 = vadd.f32 %v1544, %v1637
        %v1649 = vadd.f32 %v1549, %v1642
        %s1650 = scalar_lea.vmem %s4, 96
        %v1651 = vld [vmem:[%s1650] sm:$0xf]
        %v1652 = vld [vmem:[%s1650 + $0x4] sm:$0xf]
        %v1653 = vld [vmem:[%s1650 + $0x8] sm:$0xf]
        %v1654 = vld [vmem:[%s1650 + $0xc] sm:$0xf]
        %v1655 = vld [vmem:[%s1650 + $0x10] sm:$0xf]
        %v1656 = vld [vmem:[%s1650 + $0x14] sm:$0xf]
        %v1657 = vld [vmem:[%s1650 + $0x18] sm:$0xf]
        %v1658 = vld [vmem:[%s1650 + $0x1c] sm:$0xf]
        %vm1659 = vcmask 1044480
        %v1660 = vrot.slane %v1363, 3
        %v1661 = vrot.slane %v1373, 3
        %v1662 = vsel %vm1659, %v1660, %v1661
        %v1671 = vunpack.c.l.b16 %v1651
        %v1672 = vunpack.c.l.b16 %v1652
        %v1673 = vunpack.c.l.b16 %v1653
        %v1674 = vunpack.c.l.b16 %v1654
        %v1675 = vunpack.c.l.b16 %v1655
        %v1676 = vunpack.c.l.b16 %v1656
        %v1677 = vunpack.c.l.b16 %v1657
        %v1678 = vunpack.c.l.b16 %v1658
        %v1679 = vpack.c.b16 %v1672, %v1671
        %v1680 = vpack.c.b16 %v1674, %v1673
        %v1681 = vpack.c.b16 %v1676, %v1675
        %v1682 = vpack.c.b16 %v1678, %v1677
        %v1688 = vsel %vm1190, %v1662, 0
        %v1691 = vsel %vm1190, %v1661, 0
        %1693 = vmatprep.subr.bf16.mxu0 0
        %1694 = vmatpush1.bf16.msra.mxu0 %v1679
        %1695 = vmatprep.subr.bf16.mxu0 0
        %1696 = vmatpush1.bf16.msra.mxu0 %v1680
        %1697 = vmatprep.subr.bf16.mxu0 0
        %1698 = vmatpush1.bf16.msra.mxu0 %v1681
        %1699 = vmatprep.subr.bf16.mxu0 0
        %1700 = vmatpush1.bf16.msra.mxu0 %v1682
        %1701 = vmatprep.subr.bf16.mxu0 0
        %1702 = vmatpush1.bf16.msra.mxu0 0
        %1703 = vmatprep.subr.bf16.mxu0 0
        %1704 = vmatpush1.bf16.msra.mxu0 0
        %1705 = vmatprep.subr.bf16.mxu0 0
        %1706 = vmatpush1.bf16.msra.mxu0 0
        %1707 = vmatprep.subr.bf16.mxu0 0
        %1708 = vmatpush1.bf16.msra.mxu0 0
        %1709 = vmatprep.subr.bf16.mxu0 0
        %1710 = vmatpush1.bf16.msra.mxu0 0
        %1711 = vmatprep.subr.bf16.mxu0 0
        %1712 = vmatpush1.bf16.msra.mxu0 0
        %1713 = vmatprep.subr.bf16.mxu0 0
        %1714 = vmatpush1.bf16.msra.mxu0 0
        %1715 = vmatprep.subr.bf16.mxu0 0
        %1716 = vmatpush1.bf16.msra.mxu0 0
        %1717 = vmatprep.subr.bf16.mxu0 0
        %1718 = vmatpush1.bf16.msra.mxu0 0
        %1719 = vmatprep.subr.bf16.mxu0 0
        %1720 = vmatpush1.bf16.msra.mxu0 0
        %1721 = vmatprep.subr.bf16.mxu0 0
        %1722 = vmatpush1.bf16.msra.mxu0 0
        %1723 = vmatprep.subr.bf16.mxu0 0
        %1724 = vmatpush1.bf16.msra.mxu0 0
        %1725 = vmatprep.mubr.bf16.mxu0 0
        %1726 = vmatmul.mubr.bf16.gmra.mrb[0].mxu0 %v1688
        %v1727 = vpop.f32.mrb[0].mxu0
        %v1728 = vadd.f32 0.0, %v1727
        %v1729 = vpop.f32.mrb[0].mxu0
        %v1730 = vpop.f32.mrb[0].mxu0
        %v1731 = vadd.f32 0.0, %v1730
        %v1732 = vpop.f32.mrb[0].mxu0
        %1733 = vmatprep.mubr.bf16.mxu0 0
        %1734 = vmatmul.mubr.bf16.gmra.mrb[0].mxu0 %v1691
        %v1735 = vpop.f32.mrb[0].mxu0
        %v1736 = vadd.f32 0.0, %v1735
        %v1737 = vpop.f32.mrb[0].mxu0
        %v1738 = vpop.f32.mrb[0].mxu0
        %v1739 = vpop.f32.mrb[0].mxu0
        %1740 = vdwg.mxu0
        %v1741 = vadd.f32 %v1647, %v1728
        %v1742 = vadd.f32 %v1648, %v1731
        %v1743 = vadd.f32 %v1649, %v1736
        %s1744 = scalar_lea.vmem %s4, 128
        %v1745 = vld [vmem:[%s1744] sm:$0xf]
        %v1746 = vld [vmem:[%s1744 + $0x4] sm:$0xf]
        %v1747 = vld [vmem:[%s1744 + $0x8] sm:$0xf]
        %v1748 = vld [vmem:[%s1744 + $0xc] sm:$0xf]
        %v1749 = vld [vmem:[%s1744 + $0x10] sm:$0xf]
        %v1750 = vld [vmem:[%s1744 + $0x14] sm:$0xf]
        %v1751 = vld [vmem:[%s1744 + $0x18] sm:$0xf]
        %v1752 = vld [vmem:[%s1744 + $0x1c] sm:$0xf]
        %vm1753 = vsmask.f32 4352
        %v1754 = vrot.slane %v1385, 3
        %v1755 = vrot.slane %v1387, 4
        %v1756 = vor.u32 %v1754, %v1755
        %v1757 = vrot.slane %v1396, 3
        %v1758 = vrot.slane %v1392, 4
        %v1759 = vor.u32 %v1757, %v1758
        %v1760 = vsel %vm1753, %v1756, %v1759
        %v1769 = vunpack.c.l.b16 %v1745
        %v1770 = vunpack.c.l.b16 %v1746
        %v1771 = vunpack.c.l.b16 %v1747
        %v1772 = vunpack.c.l.b16 %v1748
        %v1773 = vunpack.c.l.b16 %v1749
        %v1774 = vunpack.c.l.b16 %v1750
        %v1775 = vunpack.c.l.b16 %v1751
        %v1776 = vunpack.c.l.b16 %v1752
        %v1777 = vpack.c.b16 %v1770, %v1769
        %v1778 = vpack.c.b16 %v1772, %v1771
        %v1779 = vpack.c.b16 %v1774, %v1773
        %v1780 = vpack.c.b16 %v1776, %v1775
        %v1786 = vsel %vm1190, %v1760, 0
        %v1789 = vsel %vm1190, %v1759, 0
        %1791 = vmatprep.subr.bf16.mxu0 0
        %1792 = vmatpush1.bf16.msra.mxu0 %v1777
        %1793 = vmatprep.subr.bf16.mxu0 0
        %1794 = vmatpush1.bf16.msra.mxu0 %v1778
        %1795 = vmatprep.subr.bf16.mxu0 0
        %1796 = vmatpush1.bf16.msra.mxu0 %v1779
        %1797 = vmatprep.subr.bf16.mxu0 0
        %1798 = vmatpush1.bf16.msra.mxu0 %v1780
        %1799 = vmatprep.subr.bf16.mxu0 0
        %1800 = vmatpush1.bf16.msra.mxu0 0
        %1801 = vmatprep.subr.bf16.mxu0 0
        %1802 = vmatpush1.bf16.msra.mxu0 0
        %1803 = vmatprep.subr.bf16.mxu0 0
        %1804 = vmatpush1.bf16.msra.mxu0 0
        %1805 = vmatprep.subr.bf16.mxu0 0
        %1806 = vmatpush1.bf16.msra.mxu0 0
        %1807 = vmatprep.subr.bf16.mxu0 0
        %1808 = vmatpush1.bf16.msra.mxu0 0
        %1809 = vmatprep.subr.bf16.mxu0 0
        %1810 = vmatpush1.bf16.msra.mxu0 0
        %1811 = vmatprep.subr.bf16.mxu0 0
        %1812 = vmatpush1.bf16.msra.mxu0 0
        %1813 = vmatprep.subr.bf16.mxu0 0
        %1814 = vmatpush1.bf16.msra.mxu0 0
        %1815 = vmatprep.subr.bf16.mxu0 0
        %1816 = vmatpush1.bf16.msra.mxu0 0
        %1817 = vmatprep.subr.bf16.mxu0 0
        %1818 = vmatpush1.bf16.msra.mxu0 0
        %1819 = vmatprep.subr.bf16.mxu0 0
        %1820 = vmatpush1.bf16.msra.mxu0 0
        %1821 = vmatprep.subr.bf16.mxu0 0
        %1822 = vmatpush1.bf16.msra.mxu0 0
        %1823 = vmatprep.mubr.bf16.mxu0 0
        %1824 = vmatmul.mubr.bf16.gmra.mrb[0].mxu0 %v1786
        %v1825 = vpop.f32.mrb[0].mxu0
        %v1826 = vadd.f32 0.0, %v1825
        %v1827 = vpop.f32.mrb[0].mxu0
        %v1828 = vpop.f32.mrb[0].mxu0
        %v1829 = vadd.f32 0.0, %v1828
        %v1830 = vpop.f32.mrb[0].mxu0
        %1831 = vmatprep.mubr.bf16.mxu0 0
        %1832 = vmatmul.mubr.bf16.gmra.mrb[0].mxu0 %v1789
        %v1833 = vpop.f32.mrb[0].mxu0
        %v1834 = vadd.f32 0.0, %v1833
        %v1835 = vpop.f32.mrb[0].mxu0
        %v1836 = vpop.f32.mrb[0].mxu0
        %v1837 = vpop.f32.mrb[0].mxu0
        %1838 = vdwg.mxu0
        %v1839 = vadd.f32 %v1741, %v1826
        %v1840 = vadd.f32 %v1742, %v1829
        %v1841 = vadd.f32 %v1743, %v1834
        %v1842 = vpack.c.bf16 %v1360, %v1359
        %v1843 = vpack.c.bf16 %v1361, %v1361
        %s1844 = scalar_lea.vmem %s4, 160
        %v1845 = vld [vmem:[%s1844] sm:$0xf]
        %v1846 = vld [vmem:[%s1844 + $0x4] sm:$0xf]
        %v1847 = vld [vmem:[%s1844 + $0x8] sm:$0xf]
        %v1848 = vld [vmem:[%s1844 + $0xc] sm:$0xf]
        %v1849 = vld [vmem:[%s1844 + $0x10] sm:$0xf]
        %v1850 = vld [vmem:[%s1844 + $0x14] sm:$0xf]
        %v1851 = vld [vmem:[%s1844 + $0x18] sm:$0xf]
        %v1852 = vld [vmem:[%s1844 + $0x1c] sm:$0xf]
        %v1861 = vunpack.c.l.b16 %v1845
        %v1862 = vunpack.c.l.b16 %v1846
        %v1863 = vunpack.c.l.b16 %v1847
        %v1864 = vunpack.c.l.b16 %v1848
        %v1865 = vunpack.c.l.b16 %v1849
        %v1866 = vunpack.c.l.b16 %v1850
        %v1867 = vunpack.c.l.b16 %v1851
        %v1868 = vunpack.c.l.b16 %v1852
        %v1869 = vpack.c.b16 %v1862, %v1861
        %v1870 = vpack.c.b16 %v1864, %v1863
        %v1871 = vpack.c.b16 %v1866, %v1865
        %v1872 = vpack.c.b16 %v1868, %v1867
        %v1878 = vsel %vm1190, %v1842, 0
        %v1881 = vsel %vm1190, %v1843, 0
        %1883 = vmatprep.subr.bf16.mxu0 0
        %1884 = vmatpush1.bf16.msra.mxu0 %v1869
        %1885 = vmatprep.subr.bf16.mxu0 0
        %1886 = vmatpush1.bf16.msra.mxu0 %v1870
        %1887 = vmatprep.subr.bf16.mxu0 0
        %1888 = vmatpush1.bf16.msra.mxu0 %v1871
        %1889 = vmatprep.subr.bf16.mxu0 0
        %1890 = vmatpush1.bf16.msra.mxu0 %v1872
        %1891 = vmatprep.subr.bf16.mxu0 0
        %1892 = vmatpush1.bf16.msra.mxu0 0
        %1893 = vmatprep.subr.bf16.mxu0 0
        %1894 = vmatpush1.bf16.msra.mxu0 0
        %1895 = vmatprep.subr.bf16.mxu0 0
        %1896 = vmatpush1.bf16.msra.mxu0 0
        %1897 = vmatprep.subr.bf16.mxu0 0
        %1898 = vmatpush1.bf16.msra.mxu0 0
        %1899 = vmatprep.subr.bf16.mxu0 0
        %1900 = vmatpush1.bf16.msra.mxu0 0
        %1901 = vmatprep.subr.bf16.mxu0 0
        %1902 = vmatpush1.bf16.msra.mxu0 0
        %1903 = vmatprep.subr.bf16.mxu0 0
        %1904 = vmatpush1.bf16.msra.mxu0 0
        %1905 = vmatprep.subr.bf16.mxu0 0
        %1906 = vmatpush1.bf16.msra.mxu0 0
        %1907 = vmatprep.subr.bf16.mxu0 0
        %1908 = vmatpush1.bf16.msra.mxu0 0
        %1909 = vmatprep.subr.bf16.mxu0 0
        %1910 = vmatpush1.bf16.msra.mxu0 0
        %1911 = vmatprep.subr.bf16.mxu0 0
        %1912 = vmatpush1.bf16.msra.mxu0 0
        %1913 = vmatprep.subr.bf16.mxu0 0
        %1914 = vmatpush1.bf16.msra.mxu0 0
        %1915 = vmatprep.mubr.bf16.mxu0 0
        %1916 = vmatmul.mubr.bf16.gmra.mrb[0].mxu0 %v1878
        %v1917 = vpop.f32.mrb[0].mxu0
        %v1918 = vadd.f32 0.0, %v1917
        %v1919 = vpop.f32.mrb[0].mxu0
        %v1920 = vpop.f32.mrb[0].mxu0
        %v1921 = vadd.f32 0.0, %v1920
        %v1922 = vpop.f32.mrb[0].mxu0
        %1923 = vmatprep.mubr.bf16.mxu0 0
        %1924 = vmatmul.mubr.bf16.gmra.mrb[0].mxu0 %v1881
        %v1925 = vpop.f32.mrb[0].mxu0
        %v1926 = vadd.f32 0.0, %v1925
        %v1927 = vpop.f32.mrb[0].mxu0
        %v1928 = vpop.f32.mrb[0].mxu0
        %v1929 = vpop.f32.mrb[0].mxu0
        %1930 = vdwg.mxu0
        %v1931 = vadd.f32 %v1839, %v1918
        %v1932 = vadd.f32 %v1840, %v1921
        %v1933 = vadd.f32 %v1841, %v1926
        %v1934 = vpack.c.bf16 %v1362, %v1361
        %s1935 = scalar_lea.vmem %s4, 192
        %v1936 = vld [vmem:[%s1935] sm:$0xf]
        %v1937 = vld [vmem:[%s1935 + $0x4] sm:$0xf]
        %v1938 = vld [vmem:[%s1935 + $0x8] sm:$0xf]
        %v1939 = vld [vmem:[%s1935 + $0xc] sm:$0xf]
        %v1940 = vld [vmem:[%s1935 + $0x10] sm:$0xf]
        %v1941 = vld [vmem:[%s1935 + $0x14] sm:$0xf]
        %v1942 = vld [vmem:[%s1935 + $0x18] sm:$0xf]
        %v1943 = vld [vmem:[%s1935 + $0x1c] sm:$0xf]
        %vm1946 = vcmask 1045504
        %v1947 = vrot.slane %v1842, 2
        %v1948 = vrot.slane %v1934, 2
        %v1949 = vsel %vm1946, %v1947, %v1948
        %v1958 = vunpack.c.l.b16 %v1936
        %v1959 = vunpack.c.l.b16 %v1937
        %v1960 = vunpack.c.l.b16 %v1938
        %v1961 = vunpack.c.l.b16 %v1939
        %v1962 = vunpack.c.l.b16 %v1940
        %v1963 = vunpack.c.l.b16 %v1941
        %v1964 = vunpack.c.l.b16 %v1942
        %v1965 = vunpack.c.l.b16 %v1943
        %v1966 = vpack.c.b16 %v1959, %v1958
        %v1967 = vpack.c.b16 %v1961, %v1960
        %v1968 = vpack.c.b16 %v1963, %v1962
        %v1969 = vpack.c.b16 %v1965, %v1964
        %v1975 = vsel %vm1190, %v1949, 0
        %v1978 = vsel %vm1190, %v1948, 0
        %1980 = vmatprep.subr.bf16.mxu0 0
        %1981 = vmatpush1.bf16.msra.mxu0 %v1966
        %1982 = vmatprep.subr.bf16.mxu0 0
        %1983 = vmatpush1.bf16.msra.mxu0 %v1967
        %1984 = vmatprep.subr.bf16.mxu0 0
        %1985 = vmatpush1.bf16.msra.mxu0 %v1968
        %1986 = vmatprep.subr.bf16.mxu0 0
        %1987 = vmatpush1.bf16.msra.mxu0 %v1969
        %1988 = vmatprep.subr.bf16.mxu0 0
        %1989 = vmatpush1.bf16.msra.mxu0 0
        %1990 = vmatprep.subr.bf16.mxu0 0
        %1991 = vmatpush1.bf16.msra.mxu0 0
        %1992 = vmatprep.subr.bf16.mxu0 0
        %1993 = vmatpush1.bf16.msra.mxu0 0
        %1994 = vmatprep.subr.bf16.mxu0 0
        %1995 = vmatpush1.bf16.msra.mxu0 0
        %1996 = vmatprep.subr.bf16.mxu0 0
        %1997 = vmatpush1.bf16.msra.mxu0 0
        %1998 = vmatprep.subr.bf16.mxu0 0
        %1999 = vmatpush1.bf16.msra.mxu0 0
        %2000 = vmatprep.subr.bf16.mxu0 0
        %2001 = vmatpush1.bf16.msra.mxu0 0
        %2002 = vmatprep.subr.bf16.mxu0 0
        %2003 = vmatpush1.bf16.msra.mxu0 0
        %2004 = vmatprep.subr.bf16.mxu0 0
        %2005 = vmatpush1.bf16.msra.mxu0 0
        %2006 = vmatprep.subr.bf16.mxu0 0
        %2007 = vmatpush1.bf16.msra.mxu0 0
        %2008 = vmatprep.subr.bf16.mxu0 0
        %2009 = vmatpush1.bf16.msra.mxu0 0
        %2010 = vmatprep.subr.bf16.mxu0 0
        %2011 = vmatpush1.bf16.msra.mxu0 0
        %2012 = vmatprep.mubr.bf16.mxu0 0
        %2013 = vmatmul.mubr.bf16.gmra.mrb[0].mxu0 %v1975
        %v2014 = vpop.f32.mrb[0].mxu0
        %v2015 = vadd.f32 0.0, %v2014
        %v2016 = vpop.f32.mrb[0].mxu0
        %v2017 = vpop.f32.mrb[0].mxu0
        %v2018 = vadd.f32 0.0, %v2017
        %v2019 = vpop.f32.mrb[0].mxu0
        %2020 = vmatprep.mubr.bf16.mxu0 0
        %2021 = vmatmul.mubr.bf16.gmra.mrb[0].mxu0 %v1978
        %v2022 = vpop.f32.mrb[0].mxu0
        %v2023 = vadd.f32 0.0, %v2022
        %v2024 = vpop.f32.mrb[0].mxu0
        %v2025 = vpop.f32.mrb[0].mxu0
        %v2026 = vpop.f32.mrb[0].mxu0
        %2027 = vdwg.mxu0
        %v2028 = vadd.f32 %v1931, %v2015
        %v2029 = vadd.f32 %v1932, %v2018
        %v2030 = vadd.f32 %v1933, %v2023
        %s2031 = scalar_lea.vmem %s4, 224
        %v2032 = vld [vmem:[%s2031] sm:$0xf]
        %v2033 = vld [vmem:[%s2031 + $0x4] sm:$0xf]
        %v2034 = vld [vmem:[%s2031 + $0x8] sm:$0xf]
        %v2035 = vld [vmem:[%s2031 + $0xc] sm:$0xf]
        %v2036 = vld [vmem:[%s2031 + $0x10] sm:$0xf]
        %v2037 = vld [vmem:[%s2031 + $0x14] sm:$0xf]
        %v2038 = vld [vmem:[%s2031 + $0x18] sm:$0xf]
        %v2039 = vld [vmem:[%s2031 + $0x1c] sm:$0xf]
        %vm2040 = vsmask.f32 5376
        %v2041 = vshrl.u32 %v1842, 16
        %v2043 = vrot.slane %v2041, 2
        %v2044 = vshll.u32 %v1842, 16
        %v2046 = vrot.slane %v2044, 3
        %v2047 = vor.u32 %v2043, %v2046
        %v2049 = vshrl.u32 %v1934, 16
        %v2051 = vrot.slane %v2049, 2
        %v2052 = vshll.u32 %v1934, 16
        %v2054 = vrot.slane %v2052, 3
        %v2055 = vor.u32 %v2051, %v2054
        %v2056 = vsel %vm2040, %v2047, %v2055
        %v2065 = vunpack.c.l.b16 %v2032
        %v2066 = vunpack.c.l.b16 %v2033
        %v2067 = vunpack.c.l.b16 %v2034
        %v2068 = vunpack.c.l.b16 %v2035
        %v2069 = vunpack.c.l.b16 %v2036
        %v2070 = vunpack.c.l.b16 %v2037
        %v2071 = vunpack.c.l.b16 %v2038
        %v2072 = vunpack.c.l.b16 %v2039
        %v2073 = vpack.c.b16 %v2066, %v2065
        %v2074 = vpack.c.b16 %v2068, %v2067
        %v2075 = vpack.c.b16 %v2070, %v2069
        %v2076 = vpack.c.b16 %v2072, %v2071
        %v2082 = vsel %vm1190, %v2056, 0
        %v2085 = vsel %vm1190, %v2055, 0
        %2087 = vmatprep.subr.bf16.mxu0 0
        %2088 = vmatpush1.bf16.msra.mxu0 %v2073
        %2089 = vmatprep.subr.bf16.mxu0 0
        %2090 = vmatpush1.bf16.msra.mxu0 %v2074
        %2091 = vmatprep.subr.bf16.mxu0 0
        %2092 = vmatpush1.bf16.msra.mxu0 %v2075
        %2093 = vmatprep.subr.bf16.mxu0 0
        %2094 = vmatpush1.bf16.msra.mxu0 %v2076
        %2095 = vmatprep.subr.bf16.mxu0 0
        %2096 = vmatpush1.bf16.msra.mxu0 0
        %2097 = vmatprep.subr.bf16.mxu0 0
        %2098 = vmatpush1.bf16.msra.mxu0 0
        %2099 = vmatprep.subr.bf16.mxu0 0
        %2100 = vmatpush1.bf16.msra.mxu0 0
        %2101 = vmatprep.subr.bf16.mxu0 0
        %2102 = vmatpush1.bf16.msra.mxu0 0
        %2103 = vmatprep.subr.bf16.mxu0 0
        %2104 = vmatpush1.bf16.msra.mxu0 0
        %2105 = vmatprep.subr.bf16.mxu0 0
        %2106 = vmatpush1.bf16.msra.mxu0 0
        %2107 = vmatprep.subr.bf16.mxu0 0
        %2108 = vmatpush1.bf16.msra.mxu0 0
        %2109 = vmatprep.subr.bf16.mxu0 0
        %2110 = vmatpush1.bf16.msra.mxu0 0
        %2111 = vmatprep.subr.bf16.mxu0 0
        %2112 = vmatpush1.bf16.msra.mxu0 0
        %2113 = vmatprep.subr.bf16.mxu0 0
        %2114 = vmatpush1.bf16.msra.mxu0 0
        %2115 = vmatprep.subr.bf16.mxu0 0
        %2116 = vmatpush1.bf16.msra.mxu0 0
        %2117 = vmatprep.subr.bf16.mxu0 0
        %2118 = vmatpush1.bf16.msra.mxu0 0
        %2119 = vmatprep.mubr.bf16.mxu0 0
        %2120 = vmatmul.mubr.bf16.gmra.mrb[0].mxu0 %v2082
        %v2121 = vpop.f32.mrb[0].mxu0
        %v2122 = vadd.f32 0.0, %v2121
        %v2123 = vpop.f32.mrb[0].mxu0
        %v2124 = vpop.f32.mrb[0].mxu0
        %v2125 = vadd.f32 0.0, %v2124
        %v2126 = vpop.f32.mrb[0].mxu0
        %2127 = vmatprep.mubr.bf16.mxu0 0
        %2128 = vmatmul.mubr.bf16.gmra.mrb[0].mxu0 %v2085
        %v2129 = vpop.f32.mrb[0].mxu0
        %v2130 = vadd.f32 0.0, %v2129
        %v2131 = vpop.f32.mrb[0].mxu0
        %v2132 = vpop.f32.mrb[0].mxu0
        %v2133 = vpop.f32.mrb[0].mxu0
        %2134 = vdwg.mxu0
        %v2135 = vadd.f32 %v2028, %v2122
        %v2136 = vadd.f32 %v2029, %v2125
        %v2137 = vadd.f32 %v2030, %v2130
        %s2138 = scalar_lea.vmem %s4, 256
        %v2139 = vld [vmem:[%s2138] sm:$0xf]
        %v2140 = vld [vmem:[%s2138 + $0x4] sm:$0xf]
        %v2141 = vld [vmem:[%s2138 + $0x8] sm:$0xf]
        %v2142 = vld [vmem:[%s2138 + $0xc] sm:$0xf]
        %v2143 = vld [vmem:[%s2138 + $0x10] sm:$0xf]
        %v2144 = vld [vmem:[%s2138 + $0x14] sm:$0xf]
        %v2145 = vld [vmem:[%s2138 + $0x18] sm:$0xf]
        %v2146 = vld [vmem:[%s2138 + $0x1c] sm:$0xf]
        %v2147 = vrot.slane %v1842, 3
        %v2148 = vrot.slane %v1934, 3
        %v2149 = vsel %vm1659, %v2147, %v2148
        %v2158 = vunpack.c.l.b16 %v2139
        %v2159 = vunpack.c.l.b16 %v2140
        %v2160 = vunpack.c.l.b16 %v2141
        %v2161 = vunpack.c.l.b16 %v2142
        %v2162 = vunpack.c.l.b16 %v2143
        %v2163 = vunpack.c.l.b16 %v2144
        %v2164 = vunpack.c.l.b16 %v2145
        %v2165 = vunpack.c.l.b16 %v2146
        %v2166 = vpack.c.b16 %v2159, %v2158
        %v2167 = vpack.c.b16 %v2161, %v2160
        %v2168 = vpack.c.b16 %v2163, %v2162
        %v2169 = vpack.c.b16 %v2165, %v2164
        %v2175 = vsel %vm1190, %v2149, 0
        %v2178 = vsel %vm1190, %v2148, 0
        %2180 = vmatprep.subr.bf16.mxu0 0
        %2181 = vmatpush1.bf16.msra.mxu0 %v2166
        %2182 = vmatprep.subr.bf16.mxu0 0
        %2183 = vmatpush1.bf16.msra.mxu0 %v2167
        %2184 = vmatprep.subr.bf16.mxu0 0
        %2185 = vmatpush1.bf16.msra.mxu0 %v2168
        %2186 = vmatprep.subr.bf16.mxu0 0
        %2187 = vmatpush1.bf16.msra.mxu0 %v2169
        %2188 = vmatprep.subr.bf16.mxu0 0
        %2189 = vmatpush1.bf16.msra.mxu0 0
        %2190 = vmatprep.subr.bf16.mxu0 0
        %2191 = vmatpush1.bf16.msra.mxu0 0
        %2192 = vmatprep.subr.bf16.mxu0 0
        %2193 = vmatpush1.bf16.msra.mxu0 0
        %2194 = vmatprep.subr.bf16.mxu0 0
        %2195 = vmatpush1.bf16.msra.mxu0 0
        %2196 = vmatprep.subr.bf16.mxu0 0
        %2197 = vmatpush1.bf16.msra.mxu0 0
        %2198 = vmatprep.subr.bf16.mxu0 0
        %2199 = vmatpush1.bf16.msra.mxu0 0
        %2200 = vmatprep.subr.bf16.mxu0 0
        %2201 = vmatpush1.bf16.msra.mxu0 0
        %2202 = vmatprep.subr.bf16.mxu0 0
        %2203 = vmatpush1.bf16.msra.mxu0 0
        %2204 = vmatprep.subr.bf16.mxu0 0
        %2205 = vmatpush1.bf16.msra.mxu0 0
        %2206 = vmatprep.subr.bf16.mxu0 0
        %2207 = vmatpush1.bf16.msra.mxu0 0
        %2208 = vmatprep.subr.bf16.mxu0 0
        %2209 = vmatpush1.bf16.msra.mxu0 0
        %2210 = vmatprep.subr.bf16.mxu0 0
        %2211 = vmatpush1.bf16.msra.mxu0 0
        %2212 = vmatprep.mubr.bf16.mxu0 0
        %2213 = vmatmul.mubr.bf16.gmra.mrb[0].mxu0 %v2175
        %v2214 = vpop.f32.mrb[0].mxu0
        %v2215 = vadd.f32 0.0, %v2214
        %v2216 = vpop.f32.mrb[0].mxu0
        %v2217 = vpop.f32.mrb[0].mxu0
        %v2218 = vadd.f32 0.0, %v2217
        %v2219 = vpop.f32.mrb[0].mxu0
        %2220 = vmatprep.mubr.bf16.mxu0 0
        %2221 = vmatmul.mubr.bf16.gmra.mrb[0].mxu0 %v2178
        %v2222 = vpop.f32.mrb[0].mxu0
        %v2223 = vadd.f32 0.0, %v2222
        %v2224 = vpop.f32.mrb[0].mxu0
        %v2225 = vpop.f32.mrb[0].mxu0
        %v2226 = vpop.f32.mrb[0].mxu0
        %2227 = vdwg.mxu0
        %v2228 = vadd.f32 %v2135, %v2215
        %v2229 = vadd.f32 %v2136, %v2218
        %v2230 = vadd.f32 %v2137, %v2223
        %v2231 = vld [vmem:[%s1] sm:$0xff]
        %v2232 = vld [vmem:[%s1 + $0x8] sm:$0xff]
        %v2233 = vld [vmem:[%s1 + $0x10] sm:$0xff]
        %2235 = vset.pattern.permute.xlu0 0
        %2236 = vperm.xlu0 %2235, %v2231
        %v2237 = vpop.permute.xlu0 %2236
        %2240 = vset.pattern.permute.xlu0 0
        %2241 = vperm.xlu0 %2240, %v2232
        %v2242 = vpop.permute.xlu0 %2241
        %2245 = vset.pattern.permute.xlu0 0
        %2246 = vperm.xlu0 %2245, %v2233
        %v2247 = vpop.permute.xlu0 %2246
        %v2249 = vadd.f32 %v2228, %v2237
        %v2250 = vadd.f32 %v2229, %v2242
        %v2251 = vadd.f32 %v2230, %v2247
        %v2252 = vsel %vm1190, %v2249, -inf
        %v2253 = vsel %vm1190, %v2250, -inf
        %v2254 = vsel %vm1190, %v2251, -inf
        %v2255 = vmax.f32 %v2252, %v2253
        %v2256 = vmax.f32 %v2255, %v2254
        %v2257 = vrot.slane %v2256, 4
        %v2258 = vmax.f32 %v2256, %v2257
        %v2259 = vrot.slane %v2258, 2
        %v2260 = vmax.f32 %v2258, %v2259
        %v2261 = vrot.slane %v2260, 1
        %v2262 = vmax.f32 %v2260, %v2261
        %v2263 = vld [vmem:[%s5] sm:$0x1]
        %v2264 = vadd.f32 %v2262, %v2263
        %v2265 = vmax.f32 %v2264, 0.0
        %v2266 = vpack.c.bf16 %v2265, %v2265
        %v2267 = vld [vmem:[%s6] sm:$0xf]
        %v2268 = vld [vmem:[%s6 + $0x4] sm:$0xf]
        %v2269 = vld [vmem:[%s6 + $0x8] sm:$0xf]
        %v2270 = vld [vmem:[%s6 + $0xc] sm:$0xf]
        %v2271 = vld [vmem:[%s6 + $0x10] sm:$0xf]
        %v2272 = vld [vmem:[%s6 + $0x14] sm:$0xf]
        %v2273 = vld [vmem:[%s6 + $0x18] sm:$0xf]
        %v2274 = vld [vmem:[%s6 + $0x1c] sm:$0xf]
        %v2275 = vld [vmem:[%s7] sm:$0x1]
        %v2284 = vunpack.c.l.b16 %v2267
        %v2285 = vunpack.c.l.b16 %v2268
        %v2286 = vunpack.c.l.b16 %v2269
        %v2287 = vunpack.c.l.b16 %v2270
        %v2288 = vunpack.c.l.b16 %v2271
        %v2289 = vunpack.c.l.b16 %v2272
        %v2290 = vunpack.c.l.b16 %v2273
        %v2291 = vunpack.c.l.b16 %v2274
        %v2292 = vpack.c.b16 %v2285, %v2284
        %v2293 = vpack.c.b16 %v2287, %v2286
        %v2294 = vpack.c.b16 %v2289, %v2288
        %v2295 = vpack.c.b16 %v2291, %v2290
        %v2301 = vsel %vm1190, %v2266, 0
        %2303 = vmatprep.subr.bf16.mxu0 0
        %2304 = vmatpush1.bf16.msra.mxu0 %v2292
        %2305 = vmatprep.subr.bf16.mxu0 0
        %2306 = vmatpush1.bf16.msra.mxu0 %v2293
        %2307 = vmatprep.subr.bf16.mxu0 0
        %2308 = vmatpush1.bf16.msra.mxu0 %v2294
        %2309 = vmatprep.subr.bf16.mxu0 0
        %2310 = vmatpush1.bf16.msra.mxu0 %v2295
        %2311 = vmatprep.subr.bf16.mxu0 0
        %2312 = vmatpush1.bf16.msra.mxu0 0
        %2313 = vmatprep.subr.bf16.mxu0 0
        %2314 = vmatpush1.bf16.msra.mxu0 0
        %2315 = vmatprep.subr.bf16.mxu0 0
        %2316 = vmatpush1.bf16.msra.mxu0 0
        %2317 = vmatprep.subr.bf16.mxu0 0
        %2318 = vmatpush1.bf16.msra.mxu0 0
        %2319 = vmatprep.subr.bf16.mxu0 0
        %2320 = vmatpush1.bf16.msra.mxu0 0
        %2321 = vmatprep.subr.bf16.mxu0 0
        %2322 = vmatpush1.bf16.msra.mxu0 0
        %2323 = vmatprep.subr.bf16.mxu0 0
        %2324 = vmatpush1.bf16.msra.mxu0 0
        %2325 = vmatprep.subr.bf16.mxu0 0
        %2326 = vmatpush1.bf16.msra.mxu0 0
        %2327 = vmatprep.subr.bf16.mxu0 0
        %2328 = vmatpush1.bf16.msra.mxu0 0
        %2329 = vmatprep.subr.bf16.mxu0 0
        %2330 = vmatpush1.bf16.msra.mxu0 0
        %2331 = vmatprep.subr.bf16.mxu0 0
        %2332 = vmatpush1.bf16.msra.mxu0 0
        %2333 = vmatprep.subr.bf16.mxu0 0
        %2334 = vmatpush1.bf16.msra.mxu0 0
        %2335 = vmatprep.mubr.bf16.mxu0 0
        %2336 = vmatmul.mubr.bf16.gmra.mrb[0].mxu0 %v2301
        %v2337 = vpop.f32.mrb[0].mxu0
        %v2338 = vadd.f32 %v2275, %v2337
        %v2339 = vpop.f32.mrb[0].mxu0
        %v2340 = vpop.f32.mrb[0].mxu0
        %v2341 = vpop.f32.mrb[0].mxu0
        %2342 = vdwg.mxu0
        %v2343 = vmax.f32 %v2338, 0.0
        %v2344 = vpack.c.bf16 %v2343, %v2343
        %v2345 = vld [vmem:[%s8] sm:$0xf]
        %v2346 = vld [vmem:[%s8 + $0x4] sm:$0xf]
        %v2347 = vld [vmem:[%s8 + $0x8] sm:$0xf]
        %v2348 = vld [vmem:[%s8 + $0xc] sm:$0xf]
        %v2349 = vld [vmem:[%s9] sm:$0x1]
        %v2354 = vunpack.c.l.b16 %v2345
        %v2355 = vunpack.c.l.b16 %v2346
        %v2356 = vunpack.c.l.b16 %v2347
        %v2357 = vunpack.c.l.b16 %v2348
        %v2358 = vpack.c.b16 %v2355, %v2354
        %v2359 = vpack.c.b16 %v2357, %v2356
        %vm2362 = vcmask 261120
        %v2364 = vsel %vm2362, %v2344, 0
        %2366 = vmatprep.subr.bf16.mxu0 0
        %2367 = vmatpush1.bf16.msra.mxu0 %v2358
        %2368 = vmatprep.subr.bf16.mxu0 0
        %2369 = vmatpush1.bf16.msra.mxu0 %v2359
        %2370 = vmatprep.subr.bf16.mxu0 0
        %2371 = vmatpush1.bf16.msra.mxu0 0
        %2372 = vmatprep.subr.bf16.mxu0 0
        %2373 = vmatpush1.bf16.msra.mxu0 0
        %2374 = vmatprep.subr.bf16.mxu0 0
        %2375 = vmatpush1.bf16.msra.mxu0 0
        %2376 = vmatprep.subr.bf16.mxu0 0
        %2377 = vmatpush1.bf16.msra.mxu0 0
        %2378 = vmatprep.subr.bf16.mxu0 0
        %2379 = vmatpush1.bf16.msra.mxu0 0
        %2380 = vmatprep.subr.bf16.mxu0 0
        %2381 = vmatpush1.bf16.msra.mxu0 0
        %2382 = vmatprep.subr.bf16.mxu0 0
        %2383 = vmatpush1.bf16.msra.mxu0 0
        %2384 = vmatprep.subr.bf16.mxu0 0
        %2385 = vmatpush1.bf16.msra.mxu0 0
        %2386 = vmatprep.subr.bf16.mxu0 0
        %2387 = vmatpush1.bf16.msra.mxu0 0
        %2388 = vmatprep.subr.bf16.mxu0 0
        %2389 = vmatpush1.bf16.msra.mxu0 0
        %2390 = vmatprep.subr.bf16.mxu0 0
        %2391 = vmatpush1.bf16.msra.mxu0 0
        %2392 = vmatprep.subr.bf16.mxu0 0
        %2393 = vmatpush1.bf16.msra.mxu0 0
        %2394 = vmatprep.subr.bf16.mxu0 0
        %2395 = vmatpush1.bf16.msra.mxu0 0
        %2396 = vmatprep.subr.bf16.mxu0 0
        %2397 = vmatpush1.bf16.msra.mxu0 0
        %2398 = vmatprep.mubr.bf16.mxu0 0
        %2399 = vmatmul.mubr.bf16.gmra.mrb[0].mxu0 %v2364
        %v2400 = vpop.f32.mrb[0].mxu0
        %v2401 = vadd.f32 %v2349, %v2400
        %v2402 = vpop.f32.mrb[0].mxu0
        %v2403 = vpop.f32.mrb[0].mxu0
        %v2404 = vpop.f32.mrb[0].mxu0
        %2405 = vdwg.mxu0
        %v2406 = vmax.f32 %v2401, 0.0
        %v2407 = vpack.c.bf16 %v2406, %v2406
        %v2408 = vld [vmem:[%s10] sm:$0xf]
        %v2409 = vld [vmem:[%s10 + $0x4] sm:$0xf]
        %v2410 = vld [vmem:[%s10 + $0x8] sm:$0xf]
        %v2411 = vld [vmem:[%s10 + $0xc] sm:$0xf]
        %v2412 = vld [vmem:[%s11] sm:$0x1]
        %v2417 = vunpack.c.l.b16 %v2408
        %v2418 = vunpack.c.l.b16 %v2409
        %v2419 = vunpack.c.l.b16 %v2410
        %v2420 = vunpack.c.l.b16 %v2411
        %v2421 = vpack.c.b16 %v2418, %v2417
        %v2422 = vpack.c.b16 %v2420, %v2419
        %v2426 = vsel %vm2362, %v2407, 0
        %2428 = vmatprep.subr.bf16.mxu0 0
        %2429 = vmatpush1.bf16.msra.mxu0 %v2421
        %2430 = vmatprep.subr.bf16.mxu0 0
        %2431 = vmatpush1.bf16.msra.mxu0 %v2422
        %2432 = vmatprep.subr.bf16.mxu0 0
        %2433 = vmatpush1.bf16.msra.mxu0 0
        %2434 = vmatprep.subr.bf16.mxu0 0
        %2435 = vmatpush1.bf16.msra.mxu0 0
        %2436 = vmatprep.subr.bf16.mxu0 0
        %2437 = vmatpush1.bf16.msra.mxu0 0
        %2438 = vmatprep.subr.bf16.mxu0 0
        %2439 = vmatpush1.bf16.msra.mxu0 0
        %2440 = vmatprep.subr.bf16.mxu0 0
        %2441 = vmatpush1.bf16.msra.mxu0 0
        %2442 = vmatprep.subr.bf16.mxu0 0
        %2443 = vmatpush1.bf16.msra.mxu0 0
        %2444 = vmatprep.subr.bf16.mxu0 0
        %2445 = vmatpush1.bf16.msra.mxu0 0
        %2446 = vmatprep.subr.bf16.mxu0 0
        %2447 = vmatpush1.bf16.msra.mxu0 0
        %2448 = vmatprep.subr.bf16.mxu0 0
        %2449 = vmatpush1.bf16.msra.mxu0 0
        %2450 = vmatprep.subr.bf16.mxu0 0
        %2451 = vmatpush1.bf16.msra.mxu0 0
        %2452 = vmatprep.subr.bf16.mxu0 0
        %2453 = vmatpush1.bf16.msra.mxu0 0
        %2454 = vmatprep.subr.bf16.mxu0 0
        %2455 = vmatpush1.bf16.msra.mxu0 0
        %2456 = vmatprep.subr.bf16.mxu0 0
        %2457 = vmatpush1.bf16.msra.mxu0 0
        %2458 = vmatprep.subr.bf16.mxu0 0
        %2459 = vmatpush1.bf16.msra.mxu0 0
        %2460 = vmatprep.mubr.bf16.mxu0 0
        %2461 = vmatmul.mubr.bf16.gmra.mrb[0].mxu0 %v2426
        %v2462 = vpop.f32.mrb[0].mxu0
        %v2463 = vadd.f32 %v2412, %v2462
        %v2464 = vpop.f32.mrb[0].mxu0
        %v2465 = vpop.f32.mrb[0].mxu0
        %v2466 = vpop.f32.mrb[0].mxu0
        %2467 = vdwg.mxu0
        %2469 = vset.pattern.permute.xlu0 6
        %2470 = vperm.xlu0 %2469, %v2463
        %v2471 = vpop.permute.xlu0 %2470
        %v2473 = vadd.f32 %v2463, %v2471
        %vm2474 = vcmask 40960
        %v2475 = vsel %vm2474, %v2463, 0.0
        %2476 = vadd.xlane.f32.xlu0 %v2475
        %v2477 = vpop.xlane.xlu0 %2476
        %v2478 = vrcp.pop 6.0
        %v2479 = vmul.f32 %v2477, %v2478
        %v2480 = vsub.f32 %v2473, %v2479
        %2481 = vst [vmem:[%s405] sm:$0x1] %v2480
        %s2482 = sand.u32 %s291, 1
        %s2483 = scalar_lea.sflag [#allocation3], %s2482
        %s2484 = sand.u32 %s291, 1
        %s2485 = scalar_lea.vmem [#allocation2], %s2484
        // Predicated region
        $region69: #{dqn_forward.1} parent=67 // pred_check
          %p2486 = pneg %p301
        $region70: #{dqn_forward.1} parent=67 // pred_check_branch
          %2488 = sbr.rel (%p2486) target = $region72
        $region71: #{dqn_forward.1} parent=67 // pred_region
          %s2490 = ssub.s32 16, 16
          %2491 = vsyncadd %s2483, %s2490
          %s2492 = smul.addr %s26, 16
          %s2493 = scalar_lea.hbm %s12, %s2492
          %s2495 = sshll.u32 %s2485, 4
          %s2496 = int_to_ptr.vmem [resolvable:$true] %s2495
          %2498 = dma.vmem_to_hbm [thread:$0]  %s2496, 16, %s2493, %s2483
        $region72: #{dqn_forward.1} parent=67 // pred_fallthru
          _
      $region68: #{dqn_forward.1} parent=5 // pred_fallthru
        _
      %p2499 = scmp.le.s32.totalorder 2, %s21
      // Predicated region
      $region73: #{dqn_forward.1} parent=5 // pred_check
        %p2500 = pneg %p2499
      $region74: #{dqn_forward.1} parent=5 // pred_check_branch
        %2502 = sbr.rel (%p2500) target = $region76
      $region75: #{dqn_forward.1} parent=5 // pred_region
        %s2503 = ssub.s32 %s21, 2
        // Predicated region
        $region77: #{dqn_forward.1} parent=75 // pred_check
          %p2504 = pneg %p307
        $region78: #{dqn_forward.1} parent=75 // pred_check_branch
          %2506 = sbr.rel (%p2504) target = $region80
        $region79: #{dqn_forward.1} parent=75 // pred_region
          %s2507 = sand.u32 %s292, 1
          %s2508 = scalar_lea.sflag [#allocation3], %s2507
          %s2509 = sand.u32 %s292, 1
          %s2510 = scalar_lea.vmem [#allocation2], %s2509
          %2511 = dma.done %s2508, 16
        $region80: #{dqn_forward.1} parent=75 // pred_fallthru
          _
      $region76: #{dqn_forward.1} parent=5 // pred_fallthru
        _
    $region6: #{dqn_forward.1} parent=1 // loop_footer
      %s25 = sadd.s32 1, %s21
    $region7: #{dqn_forward.1} parent=1 // loop_footer_branch
      %20 = sbr.rel target = $region3
    $region8: #{dqn_forward.1} parent=1 // loop_exit
      _
    %2512 = vsyncpa [#allocation3], 1
    %s2513 = scalar_lea.sflag [#allocation3], 1
    %2514 = vsyncpa %s2513, 1

</llo_original>
